<compile_context>
chip_gen: v7x
topology: tpu7x:2x2x1
jax: 0.10.0
libtpu: 0.0.40
codegen_flags: <defaults>
</compile_context>

<pallas_src>
import jax
import jax.numpy as jnp
from jax import lax
from jax.experimental import pallas as pl
from jax.experimental.pallas import tpu as pltpu


def gru_discriminator_kernel(x_ref, w_ih_ref, w_hh_ref, b_ih_ref, b_hh_ref,
                             fc_w_ref, fc_b_ref, out_ref):
    # x_ref:    (T, B, 1)  normalized input sequence (seq-major)
    # w_ih_ref: (1, 3H)    input->hidden weights (gate order r, z, n)
    # w_hh_ref: (H, 3H)    hidden->hidden weights, transposed
    # b_ih_ref: (1, 3H)
    # b_hh_ref: (1, 3H)
    # fc_w_ref: (1, H)
    # fc_b_ref: (1, 1)
    # out_ref:  (B, 1)
    T, B, _ = x_ref.shape
    H = w_hh_ref.shape[0]

    # ---- Hoist everything independent of h_{t-1} out of the recurrence. ----
    x = x_ref[...]                                   # (T, B, 1)
    w_ih = w_ih_ref[...]                             # (1, 3H)
    b_ih = b_ih_ref[...]                             # (1, 3H)
    # gi for all timesteps at once: (T, B, 1) * (1, 1, 3H) + (1, 1, 3H)
    gi_all = x * w_ih[None, :, :] + b_ih[None, :, :]  # (T, B, 3H)

    w_hh = w_hh_ref[...]                             # (H, 3H)  (loaded once)
    b_hh = b_hh_ref[...]                             # (1, 3H)

    # ---- Serial recurrence: h carried in vregs, loop fully unrolled. ----
    h = jnp.zeros((B, H), jnp.float32)
    for t in range(T):                               # static trip count -> unrolled
        gi = gi_all[t]                               # (B, 3H) static slice
        gh = jnp.dot(h, w_hh,
                     preferred_element_type=jnp.float32) + b_hh   # (B, 3H)
        r = jax.nn.sigmoid(gi[:, 0:H] + gh[:, 0:H])
        z = jax.nn.sigmoid(gi[:, H:2 * H] + gh[:, H:2 * H])
        n = jnp.tanh(gi[:, 2 * H:3 * H] + r * gh[:, 2 * H:3 * H])
        h = (1.0 - z) * n + z * h

    # ---- Final FC + sigmoid: VPU multiply + lane reduce (no N=1 MXU pass). ----
    logit = jnp.sum(h * fc_w_ref[...], axis=1, keepdims=True) + fc_b_ref[...]  # (B, 1)
    out_ref[...] = jax.nn.sigmoid(logit)


def discriminator_forward(prediction, condition, params, mean=0.0, std=1.0):
    """Glue in plain JAX: concat + normalize + layout plumbing; hot path in Pallas."""
    B = condition.shape[0]
    d_input = jnp.concatenate([condition, prediction.reshape(-1, 1)], axis=1)  # (B, T)
    d_input = (d_input - mean) / std
    x_seq = d_input.T.astype(jnp.float32)[:, :, None]                          # (T, B, 1)

    H = params["weight_hh"].shape[1]

    # Re-layout parameters for the kernel.
    w_ih = params["weight_ih"].reshape(1, 3 * H).astype(jnp.float32)   # (3H,1) -> (1,3H)
    w_hh = params["weight_hh"].T.astype(jnp.float32)                   # (3H,H) -> (H,3H)
    b_ih = params["bias_ih"].reshape(1, 3 * H).astype(jnp.float32)
    b_hh = params["bias_hh"].reshape(1, 3 * H).astype(jnp.float32)
    fc_w = params["fc_weight"].reshape(1, H).astype(jnp.float32)       # (1, H)
    fc_b = params["fc_bias"].reshape(1, 1).astype(jnp.float32)

    vmem = pl.BlockSpec(memory_space=pltpu.MemorySpace.VMEM)
    out = pl.pallas_call(
        gru_discriminator_kernel,
        out_shape=jax.ShapeDtypeStruct((B, 1), jnp.float32),
        in_specs=[vmem] * 7,
        out_specs=vmem,
    )(x_seq, w_ih, w_hh, b_ih, b_hh, fc_w, fc_b)
    return out


def reference_forward(prediction, condition, params, mean=0.0, std=1.0):
    """Pure-JAX reference mirroring torch.nn.GRU + Linear + Sigmoid."""
    H = params["weight_hh"].shape[1]
    d_input = jnp.concatenate([condition, prediction.reshape(-1, 1)], axis=1)
    d_input = (d_input - mean) / std
    x_seq = d_input.T[:, :, None]                                       # (T, B, 1)

    w_ih, w_hh = params["weight_ih"], params["weight_hh"]               # (3H,1), (3H,H)
    b_ih, b_hh = params["bias_ih"], params["bias_hh"]                   # (3H,), (3H,)

    def cell(h, x_t):
        gi = x_t @ w_ih.T + b_ih
        gh = h @ w_hh.T + b_hh
        r = jax.nn.sigmoid(gi[:, 0:H] + gh[:, 0:H])
        z = jax.nn.sigmoid(gi[:, H:2 * H] + gh[:, H:2 * H])
        n = jnp.tanh(gi[:, 2 * H:3 * H] + r * gh[:, 2 * H:3 * H])
        h_new = (1.0 - z) * n + z * h
        return h_new, None

    h0 = jnp.zeros((x_seq.shape[1], H), jnp.float32)
    h_last, _ = lax.scan(cell, h0, x_seq)
    logit = h_last @ params["fc_weight"].T + params["fc_bias"]
    return jax.nn.sigmoid(logit)


if __name__ == "__main__":
    # Small shapes consistent with the module.
    condition_size = 15          # T = condition_size + 1 = 16
    H = 32                       # discriminator_latent_size
    B = 8                        # batch

    key = jax.random.PRNGKey(0)
    keys = jax.random.split(key, 8)

    # Deterministic synthetic parameters with PyTorch GRU/Linear shapes.
    k = 1.0 / jnp.sqrt(H)
    params = {
        "weight_ih": jax.random.uniform(keys[0], (3 * H, 1), jnp.float32, -k, k),
        "weight_hh": jax.random.uniform(keys[1], (3 * H, H), jnp.float32, -k, k),
        "bias_ih":   jax.random.uniform(keys[2], (3 * H,), jnp.float32, -k, k),
        "bias_hh":   jax.random.uniform(keys[3], (3 * H,), jnp.float32, -k, k),
        "fc_weight": jax.random.uniform(keys[4], (1, H), jnp.float32, -k, k),
        "fc_bias":   jax.random.uniform(keys[5], (1,), jnp.float32, -k, k),
    }

    prediction = jax.random.normal(keys[6], (B,), jnp.float32)
    condition = jax.random.normal(keys[7], (B, condition_size), jnp.float32)

    out = discriminator_forward(prediction, condition, params, mean=0.0, std=1.0)
    out = jax.block_until_ready(out)

    ref = reference_forward(prediction, condition, params, mean=0.0, std=1.0)
    assert out.shape == (B, 1)
    assert jnp.allclose(out, ref, atol=1e-5, rtol=1e-5), (out, ref)

    print("KERNEL_OK")
</pallas_src>

<mosaic_0001>
module attributes {stable_mosaic.version = 11 : i64} {
  func.func @gru_discriminator_kernel(%arg0: memref<16x8x1xf32, #tpu.memory_space<vmem>>, %arg1: memref<1x96xf32, #tpu.memory_space<vmem>>, %arg2: memref<32x96xf32, #tpu.memory_space<vmem>>, %arg3: memref<1x96xf32, #tpu.memory_space<vmem>>, %arg4: memref<1x96xf32, #tpu.memory_space<vmem>>, %arg5: memref<1x32xf32, #tpu.memory_space<vmem>>, %arg6: memref<1x1xf32, #tpu.memory_space<vmem>>, %arg7: memref<8x1xf32, #tpu.memory_space<vmem>>) attributes {dimension_semantics = [], scalar_prefetch = 0 : i64, scratch_operands = 0 : i64, tpu.core_type = #tpu.core_type<tc>} {
    %c0 = arith.constant 0 : index
    %c0_0 = arith.constant 0 : index
    %c0_1 = arith.constant 0 : index
    %0 = vector.load %arg0[%c0, %c0_0, %c0_1] : memref<16x8x1xf32, #tpu.memory_space<vmem>>, vector<16x8x1xf32>
    %c0_2 = arith.constant 0 : index
    %c0_3 = arith.constant 0 : index
    %1 = vector.load %arg1[%c0_2, %c0_3] : memref<1x96xf32, #tpu.memory_space<vmem>>, vector<1x96xf32>
    %c0_4 = arith.constant 0 : index
    %c0_5 = arith.constant 0 : index
    %2 = vector.load %arg3[%c0_4, %c0_5] : memref<1x96xf32, #tpu.memory_space<vmem>>, vector<1x96xf32>
    %3 = vector.shape_cast %1 : vector<1x96xf32> to vector<1x1x96xf32>
    %4 = vector.broadcast %0 : vector<16x8x1xf32> to vector<16x8x96xf32>
    %5 = vector.broadcast %3 : vector<1x1x96xf32> to vector<16x8x96xf32>
    %6 = arith.mulf %4, %5 : vector<16x8x96xf32>
    %7 = vector.shape_cast %2 : vector<1x96xf32> to vector<1x1x96xf32>
    %8 = vector.broadcast %7 : vector<1x1x96xf32> to vector<16x8x96xf32>
    %9 = arith.addf %6, %8 : vector<16x8x96xf32>
    %c0_6 = arith.constant 0 : index
    %c0_7 = arith.constant 0 : index
    %10 = vector.load %arg2[%c0_6, %c0_7] : memref<32x96xf32, #tpu.memory_space<vmem>>, vector<32x96xf32>
    %c0_8 = arith.constant 0 : index
    %c0_9 = arith.constant 0 : index
    %11 = vector.load %arg4[%c0_8, %c0_9] : memref<1x96xf32, #tpu.memory_space<vmem>>, vector<1x96xf32>
    %cst = arith.constant 0.000000e+00 : f32
    %12 = vector.broadcast %cst : f32 to vector<8x32xf32>
    %13 = vector.extract_strided_slice %9 {offsets = [0, 0, 0], sizes = [1, 8, 96], strides = [1, 1, 1]} : vector<16x8x96xf32> to vector<1x8x96xf32>
    %14 = vector.shape_cast %13 : vector<1x8x96xf32> to vector<8x96xf32>
    %cst_10 = arith.constant dense<0.000000e+00> : vector<8x96xf32>
    %15 = tpu.matmul %12, %10, %cst_10 {dimension_numbers = #tpu.dot_dimension_numbers<[1], [0], [0], [1], [0, 0, 1, 1], [], []>} : vector<8x32xf32>, vector<32x96xf32>, vector<8x96xf32> -> vector<8x96xf32>
    %16 = vector.broadcast %11 : vector<1x96xf32> to vector<8x96xf32>
    %17 = arith.addf %15, %16 : vector<8x96xf32>
    %18 = vector.extract_strided_slice %14 {offsets = [0, 0], sizes = [8, 32], strides = [1, 1]} : vector<8x96xf32> to vector<8x32xf32>
    %19 = vector.extract_strided_slice %17 {offsets = [0, 0], sizes = [8, 32], strides = [1, 1]} : vector<8x96xf32> to vector<8x32xf32>
    %20 = arith.addf %18, %19 : vector<8x32xf32>
    %21 = arith.negf %20 : vector<8x32xf32>
    %22 = math.exp %21 : vector<8x32xf32>
    %cst_11 = arith.constant 1.000000e+00 : f32
    %23 = vector.broadcast %cst_11 : f32 to vector<8x32xf32>
    %24 = arith.addf %23, %22 : vector<8x32xf32>
    %25 = arith.divf %23, %24 : vector<8x32xf32>
    %26 = vector.extract_strided_slice %14 {offsets = [0, 32], sizes = [8, 32], strides = [1, 1]} : vector<8x96xf32> to vector<8x32xf32>
    %27 = vector.extract_strided_slice %17 {offsets = [0, 32], sizes = [8, 32], strides = [1, 1]} : vector<8x96xf32> to vector<8x32xf32>
    %28 = arith.addf %26, %27 : vector<8x32xf32>
    %29 = arith.negf %28 : vector<8x32xf32>
    %30 = math.exp %29 : vector<8x32xf32>
    %cst_12 = arith.constant 1.000000e+00 : f32
    %31 = vector.broadcast %cst_12 : f32 to vector<8x32xf32>
    %32 = arith.addf %31, %30 : vector<8x32xf32>
    %33 = arith.divf %31, %32 : vector<8x32xf32>
    %34 = vector.extract_strided_slice %14 {offsets = [0, 64], sizes = [8, 32], strides = [1, 1]} : vector<8x96xf32> to vector<8x32xf32>
    %35 = vector.extract_strided_slice %17 {offsets = [0, 64], sizes = [8, 32], strides = [1, 1]} : vector<8x96xf32> to vector<8x32xf32>
    %36 = arith.mulf %25, %35 : vector<8x32xf32>
    %37 = arith.addf %34, %36 : vector<8x32xf32>
    %38 = math.tanh %37 : vector<8x32xf32>
    %cst_13 = arith.constant 1.000000e+00 : f32
    %39 = vector.broadcast %cst_13 : f32 to vector<8x32xf32>
    %40 = arith.subf %39, %33 : vector<8x32xf32>
    %41 = arith.mulf %40, %38 : vector<8x32xf32>
    %42 = arith.mulf %33, %12 : vector<8x32xf32>
    %43 = arith.addf %41, %42 : vector<8x32xf32>
    %44 = vector.extract_strided_slice %9 {offsets = [1, 0, 0], sizes = [1, 8, 96], strides = [1, 1, 1]} : vector<16x8x96xf32> to vector<1x8x96xf32>
    %45 = vector.shape_cast %44 : vector<1x8x96xf32> to vector<8x96xf32>
    %cst_14 = arith.constant dense<0.000000e+00> : vector<8x96xf32>
    %46 = tpu.matmul %43, %10, %cst_14 {dimension_numbers = #tpu.dot_dimension_numbers<[1], [0], [0], [1], [0, 0, 1, 1], [], []>} : vector<8x32xf32>, vector<32x96xf32>, vector<8x96xf32> -> vector<8x96xf32>
    %47 = vector.broadcast %11 : vector<1x96xf32> to vector<8x96xf32>
    %48 = arith.addf %46, %47 : vector<8x96xf32>
    %49 = vector.extract_strided_slice %45 {offsets = [0, 0], sizes = [8, 32], strides = [1, 1]} : vector<8x96xf32> to vector<8x32xf32>
    %50 = vector.extract_strided_slice %48 {offsets = [0, 0], sizes = [8, 32], strides = [1, 1]} : vector<8x96xf32> to vector<8x32xf32>
    %51 = arith.addf %49, %50 : vector<8x32xf32>
    %52 = arith.negf %51 : vector<8x32xf32>
    %53 = math.exp %52 : vector<8x32xf32>
    %cst_15 = arith.constant 1.000000e+00 : f32
    %54 = vector.broadcast %cst_15 : f32 to vector<8x32xf32>
    %55 = arith.addf %54, %53 : vector<8x32xf32>
    %56 = arith.divf %54, %55 : vector<8x32xf32>
    %57 = vector.extract_strided_slice %45 {offsets = [0, 32], sizes = [8, 32], strides = [1, 1]} : vector<8x96xf32> to vector<8x32xf32>
    %58 = vector.extract_strided_slice %48 {offsets = [0, 32], sizes = [8, 32], strides = [1, 1]} : vector<8x96xf32> to vector<8x32xf32>
    %59 = arith.addf %57, %58 : vector<8x32xf32>
    %60 = arith.negf %59 : vector<8x32xf32>
    %61 = math.exp %60 : vector<8x32xf32>
    %cst_16 = arith.constant 1.000000e+00 : f32
    %62 = vector.broadcast %cst_16 : f32 to vector<8x32xf32>
    %63 = arith.addf %62, %61 : vector<8x32xf32>
    %64 = arith.divf %62, %63 : vector<8x32xf32>
    %65 = vector.extract_strided_slice %45 {offsets = [0, 64], sizes = [8, 32], strides = [1, 1]} : vector<8x96xf32> to vector<8x32xf32>
    %66 = vector.extract_strided_slice %48 {offsets = [0, 64], sizes = [8, 32], strides = [1, 1]} : vector<8x96xf32> to vector<8x32xf32>
    %67 = arith.mulf %56, %66 : vector<8x32xf32>
    %68 = arith.addf %65, %67 : vector<8x32xf32>
    %69 = math.tanh %68 : vector<8x32xf32>
    %cst_17 = arith.constant 1.000000e+00 : f32
    %70 = vector.broadcast %cst_17 : f32 to vector<8x32xf32>
    %71 = arith.subf %70, %64 : vector<8x32xf32>
    %72 = arith.mulf %71, %69 : vector<8x32xf32>
    %73 = arith.mulf %64, %43 : vector<8x32xf32>
    %74 = arith.addf %72, %73 : vector<8x32xf32>
    %75 = vector.extract_strided_slice %9 {offsets = [2, 0, 0], sizes = [1, 8, 96], strides = [1, 1, 1]} : vector<16x8x96xf32> to vector<1x8x96xf32>
    %76 = vector.shape_cast %75 : vector<1x8x96xf32> to vector<8x96xf32>
    %cst_18 = arith.constant dense<0.000000e+00> : vector<8x96xf32>
    %77 = tpu.matmul %74, %10, %cst_18 {dimension_numbers = #tpu.dot_dimension_numbers<[1], [0], [0], [1], [0, 0, 1, 1], [], []>} : vector<8x32xf32>, vector<32x96xf32>, vector<8x96xf32> -> vector<8x96xf32>
    %78 = vector.broadcast %11 : vector<1x96xf32> to vector<8x96xf32>
    %79 = arith.addf %77, %78 : vector<8x96xf32>
    %80 = vector.extract_strided_slice %76 {offsets = [0, 0], sizes = [8, 32], strides = [1, 1]} : vector<8x96xf32> to vector<8x32xf32>
    %81 = vector.extract_strided_slice %79 {offsets = [0, 0], sizes = [8, 32], strides = [1, 1]} : vector<8x96xf32> to vector<8x32xf32>
    %82 = arith.addf %80, %81 : vector<8x32xf32>
    %83 = arith.negf %82 : vector<8x32xf32>
    %84 = math.exp %83 : vector<8x32xf32>
    %cst_19 = arith.constant 1.000000e+00 : f32
    %85 = vector.broadcast %cst_19 : f32 to vector<8x32xf32>
    %86 = arith.addf %85, %84 : vector<8x32xf32>
    %87 = arith.divf %85, %86 : vector<8x32xf32>
    %88 = vector.extract_strided_slice %76 {offsets = [0, 32], sizes = [8, 32], strides = [1, 1]} : vector<8x96xf32> to vector<8x32xf32>
    %89 = vector.extract_strided_slice %79 {offsets = [0, 32], sizes = [8, 32], strides = [1, 1]} : vector<8x96xf32> to vector<8x32xf32>
    %90 = arith.addf %88, %89 : vector<8x32xf32>
    %91 = arith.negf %90 : vector<8x32xf32>
    %92 = math.exp %91 : vector<8x32xf32>
    %cst_20 = arith.constant 1.000000e+00 : f32
    %93 = vector.broadcast %cst_20 : f32 to vector<8x32xf32>
    %94 = arith.addf %93, %92 : vector<8x32xf32>
    %95 = arith.divf %93, %94 : vector<8x32xf32>
    %96 = vector.extract_strided_slice %76 {offsets = [0, 64], sizes = [8, 32], strides = [1, 1]} : vector<8x96xf32> to vector<8x32xf32>
    %97 = vector.extract_strided_slice %79 {offsets = [0, 64], sizes = [8, 32], strides = [1, 1]} : vector<8x96xf32> to vector<8x32xf32>
    %98 = arith.mulf %87, %97 : vector<8x32xf32>
    %99 = arith.addf %96, %98 : vector<8x32xf32>
    %100 = math.tanh %99 : vector<8x32xf32>
    %cst_21 = arith.constant 1.000000e+00 : f32
    %101 = vector.broadcast %cst_21 : f32 to vector<8x32xf32>
    %102 = arith.subf %101, %95 : vector<8x32xf32>
    %103 = arith.mulf %102, %100 : vector<8x32xf32>
    %104 = arith.mulf %95, %74 : vector<8x32xf32>
    %105 = arith.addf %103, %104 : vector<8x32xf32>
    %106 = vector.extract_strided_slice %9 {offsets = [3, 0, 0], sizes = [1, 8, 96], strides = [1, 1, 1]} : vector<16x8x96xf32> to vector<1x8x96xf32>
    %107 = vector.shape_cast %106 : vector<1x8x96xf32> to vector<8x96xf32>
    %cst_22 = arith.constant dense<0.000000e+00> : vector<8x96xf32>
    %108 = tpu.matmul %105, %10, %cst_22 {dimension_numbers = #tpu.dot_dimension_numbers<[1], [0], [0], [1], [0, 0, 1, 1], [], []>} : vector<8x32xf32>, vector<32x96xf32>, vector<8x96xf32> -> vector<8x96xf32>
    %109 = vector.broadcast %11 : vector<1x96xf32> to vector<8x96xf32>
    %110 = arith.addf %108, %109 : vector<8x96xf32>
    %111 = vector.extract_strided_slice %107 {offsets = [0, 0], sizes = [8, 32], strides = [1, 1]} : vector<8x96xf32> to vector<8x32xf32>
    %112 = vector.extract_strided_slice %110 {offsets = [0, 0], sizes = [8, 32], strides = [1, 1]} : vector<8x96xf32> to vector<8x32xf32>
    %113 = arith.addf %111, %112 : vector<8x32xf32>
    %114 = arith.negf %113 : vector<8x32xf32>
    %115 = math.exp %114 : vector<8x32xf32>
    %cst_23 = arith.constant 1.000000e+00 : f32
    %116 = vector.broadcast %cst_23 : f32 to vector<8x32xf32>
    %117 = arith.addf %116, %115 : vector<8x32xf32>
    %118 = arith.divf %116, %117 : vector<8x32xf32>
    %119 = vector.extract_strided_slice %107 {offsets = [0, 32], sizes = [8, 32], strides = [1, 1]} : vector<8x96xf32> to vector<8x32xf32>
    %120 = vector.extract_strided_slice %110 {offsets = [0, 32], sizes = [8, 32], strides = [1, 1]} : vector<8x96xf32> to vector<8x32xf32>
    %121 = arith.addf %119, %120 : vector<8x32xf32>
    %122 = arith.negf %121 : vector<8x32xf32>
    %123 = math.exp %122 : vector<8x32xf32>
    %cst_24 = arith.constant 1.000000e+00 : f32
    %124 = vector.broadcast %cst_24 : f32 to vector<8x32xf32>
    %125 = arith.addf %124, %123 : vector<8x32xf32>
    %126 = arith.divf %124, %125 : vector<8x32xf32>
    %127 = vector.extract_strided_slice %107 {offsets = [0, 64], sizes = [8, 32], strides = [1, 1]} : vector<8x96xf32> to vector<8x32xf32>
    %128 = vector.extract_strided_slice %110 {offsets = [0, 64], sizes = [8, 32], strides = [1, 1]} : vector<8x96xf32> to vector<8x32xf32>
    %129 = arith.mulf %118, %128 : vector<8x32xf32>
    %130 = arith.addf %127, %129 : vector<8x32xf32>
    %131 = math.tanh %130 : vector<8x32xf32>
    %cst_25 = arith.constant 1.000000e+00 : f32
    %132 = vector.broadcast %cst_25 : f32 to vector<8x32xf32>
    %133 = arith.subf %132, %126 : vector<8x32xf32>
    %134 = arith.mulf %133, %131 : vector<8x32xf32>
    %135 = arith.mulf %126, %105 : vector<8x32xf32>
    %136 = arith.addf %134, %135 : vector<8x32xf32>
    %137 = vector.extract_strided_slice %9 {offsets = [4, 0, 0], sizes = [1, 8, 96], strides = [1, 1, 1]} : vector<16x8x96xf32> to vector<1x8x96xf32>
    %138 = vector.shape_cast %137 : vector<1x8x96xf32> to vector<8x96xf32>
    %cst_26 = arith.constant dense<0.000000e+00> : vector<8x96xf32>
    %139 = tpu.matmul %136, %10, %cst_26 {dimension_numbers = #tpu.dot_dimension_numbers<[1], [0], [0], [1], [0, 0, 1, 1], [], []>} : vector<8x32xf32>, vector<32x96xf32>, vector<8x96xf32> -> vector<8x96xf32>
    %140 = vector.broadcast %11 : vector<1x96xf32> to vector<8x96xf32>
    %141 = arith.addf %139, %140 : vector<8x96xf32>
    %142 = vector.extract_strided_slice %138 {offsets = [0, 0], sizes = [8, 32], strides = [1, 1]} : vector<8x96xf32> to vector<8x32xf32>
    %143 = vector.extract_strided_slice %141 {offsets = [0, 0], sizes = [8, 32], strides = [1, 1]} : vector<8x96xf32> to vector<8x32xf32>
    %144 = arith.addf %142, %143 : vector<8x32xf32>
    %145 = arith.negf %144 : vector<8x32xf32>
    %146 = math.exp %145 : vector<8x32xf32>
    %cst_27 = arith.constant 1.000000e+00 : f32
    %147 = vector.broadcast %cst_27 : f32 to vector<8x32xf32>
    %148 = arith.addf %147, %146 : vector<8x32xf32>
    %149 = arith.divf %147, %148 : vector<8x32xf32>
    %150 = vector.extract_strided_slice %138 {offsets = [0, 32], sizes = [8, 32], strides = [1, 1]} : vector<8x96xf32> to vector<8x32xf32>
    %151 = vector.extract_strided_slice %141 {offsets = [0, 32], sizes = [8, 32], strides = [1, 1]} : vector<8x96xf32> to vector<8x32xf32>
    %152 = arith.addf %150, %151 : vector<8x32xf32>
    %153 = arith.negf %152 : vector<8x32xf32>
    %154 = math.exp %153 : vector<8x32xf32>
    %cst_28 = arith.constant 1.000000e+00 : f32
    %155 = vector.broadcast %cst_28 : f32 to vector<8x32xf32>
    %156 = arith.addf %155, %154 : vector<8x32xf32>
    %157 = arith.divf %155, %156 : vector<8x32xf32>
    %158 = vector.extract_strided_slice %138 {offsets = [0, 64], sizes = [8, 32], strides = [1, 1]} : vector<8x96xf32> to vector<8x32xf32>
    %159 = vector.extract_strided_slice %141 {offsets = [0, 64], sizes = [8, 32], strides = [1, 1]} : vector<8x96xf32> to vector<8x32xf32>
    %160 = arith.mulf %149, %159 : vector<8x32xf32>
    %161 = arith.addf %158, %160 : vector<8x32xf32>
    %162 = math.tanh %161 : vector<8x32xf32>
    %cst_29 = arith.constant 1.000000e+00 : f32
    %163 = vector.broadcast %cst_29 : f32 to vector<8x32xf32>
    %164 = arith.subf %163, %157 : vector<8x32xf32>
    %165 = arith.mulf %164, %162 : vector<8x32xf32>
    %166 = arith.mulf %157, %136 : vector<8x32xf32>
    %167 = arith.addf %165, %166 : vector<8x32xf32>
    %168 = vector.extract_strided_slice %9 {offsets = [5, 0, 0], sizes = [1, 8, 96], strides = [1, 1, 1]} : vector<16x8x96xf32> to vector<1x8x96xf32>
    %169 = vector.shape_cast %168 : vector<1x8x96xf32> to vector<8x96xf32>
    %cst_30 = arith.constant dense<0.000000e+00> : vector<8x96xf32>
    %170 = tpu.matmul %167, %10, %cst_30 {dimension_numbers = #tpu.dot_dimension_numbers<[1], [0], [0], [1], [0, 0, 1, 1], [], []>} : vector<8x32xf32>, vector<32x96xf32>, vector<8x96xf32> -> vector<8x96xf32>
    %171 = vector.broadcast %11 : vector<1x96xf32> to vector<8x96xf32>
    %172 = arith.addf %170, %171 : vector<8x96xf32>
    %173 = vector.extract_strided_slice %169 {offsets = [0, 0], sizes = [8, 32], strides = [1, 1]} : vector<8x96xf32> to vector<8x32xf32>
    %174 = vector.extract_strided_slice %172 {offsets = [0, 0], sizes = [8, 32], strides = [1, 1]} : vector<8x96xf32> to vector<8x32xf32>
    %175 = arith.addf %173, %174 : vector<8x32xf32>
    %176 = arith.negf %175 : vector<8x32xf32>
    %177 = math.exp %176 : vector<8x32xf32>
    %cst_31 = arith.constant 1.000000e+00 : f32
    %178 = vector.broadcast %cst_31 : f32 to vector<8x32xf32>
    %179 = arith.addf %178, %177 : vector<8x32xf32>
    %180 = arith.divf %178, %179 : vector<8x32xf32>
    %181 = vector.extract_strided_slice %169 {offsets = [0, 32], sizes = [8, 32], strides = [1, 1]} : vector<8x96xf32> to vector<8x32xf32>
    %182 = vector.extract_strided_slice %172 {offsets = [0, 32], sizes = [8, 32], strides = [1, 1]} : vector<8x96xf32> to vector<8x32xf32>
    %183 = arith.addf %181, %182 : vector<8x32xf32>
    %184 = arith.negf %183 : vector<8x32xf32>
    %185 = math.exp %184 : vector<8x32xf32>
    %cst_32 = arith.constant 1.000000e+00 : f32
    %186 = vector.broadcast %cst_32 : f32 to vector<8x32xf32>
    %187 = arith.addf %186, %185 : vector<8x32xf32>
    %188 = arith.divf %186, %187 : vector<8x32xf32>
    %189 = vector.extract_strided_slice %169 {offsets = [0, 64], sizes = [8, 32], strides = [1, 1]} : vector<8x96xf32> to vector<8x32xf32>
    %190 = vector.extract_strided_slice %172 {offsets = [0, 64], sizes = [8, 32], strides = [1, 1]} : vector<8x96xf32> to vector<8x32xf32>
    %191 = arith.mulf %180, %190 : vector<8x32xf32>
    %192 = arith.addf %189, %191 : vector<8x32xf32>
    %193 = math.tanh %192 : vector<8x32xf32>
    %cst_33 = arith.constant 1.000000e+00 : f32
    %194 = vector.broadcast %cst_33 : f32 to vector<8x32xf32>
    %195 = arith.subf %194, %188 : vector<8x32xf32>
    %196 = arith.mulf %195, %193 : vector<8x32xf32>
    %197 = arith.mulf %188, %167 : vector<8x32xf32>
    %198 = arith.addf %196, %197 : vector<8x32xf32>
    %199 = vector.extract_strided_slice %9 {offsets = [6, 0, 0], sizes = [1, 8, 96], strides = [1, 1, 1]} : vector<16x8x96xf32> to vector<1x8x96xf32>
    %200 = vector.shape_cast %199 : vector<1x8x96xf32> to vector<8x96xf32>
    %cst_34 = arith.constant dense<0.000000e+00> : vector<8x96xf32>
    %201 = tpu.matmul %198, %10, %cst_34 {dimension_numbers = #tpu.dot_dimension_numbers<[1], [0], [0], [1], [0, 0, 1, 1], [], []>} : vector<8x32xf32>, vector<32x96xf32>, vector<8x96xf32> -> vector<8x96xf32>
    %202 = vector.broadcast %11 : vector<1x96xf32> to vector<8x96xf32>
    %203 = arith.addf %201, %202 : vector<8x96xf32>
    %204 = vector.extract_strided_slice %200 {offsets = [0, 0], sizes = [8, 32], strides = [1, 1]} : vector<8x96xf32> to vector<8x32xf32>
    %205 = vector.extract_strided_slice %203 {offsets = [0, 0], sizes = [8, 32], strides = [1, 1]} : vector<8x96xf32> to vector<8x32xf32>
    %206 = arith.addf %204, %205 : vector<8x32xf32>
    %207 = arith.negf %206 : vector<8x32xf32>
    %208 = math.exp %207 : vector<8x32xf32>
    %cst_35 = arith.constant 1.000000e+00 : f32
    %209 = vector.broadcast %cst_35 : f32 to vector<8x32xf32>
    %210 = arith.addf %209, %208 : vector<8x32xf32>
    %211 = arith.divf %209, %210 : vector<8x32xf32>
    %212 = vector.extract_strided_slice %200 {offsets = [0, 32], sizes = [8, 32], strides = [1, 1]} : vector<8x96xf32> to vector<8x32xf32>
    %213 = vector.extract_strided_slice %203 {offsets = [0, 32], sizes = [8, 32], strides = [1, 1]} : vector<8x96xf32> to vector<8x32xf32>
    %214 = arith.addf %212, %213 : vector<8x32xf32>
    %215 = arith.negf %214 : vector<8x32xf32>
    %216 = math.exp %215 : vector<8x32xf32>
    %cst_36 = arith.constant 1.000000e+00 : f32
    %217 = vector.broadcast %cst_36 : f32 to vector<8x32xf32>
    %218 = arith.addf %217, %216 : vector<8x32xf32>
    %219 = arith.divf %217, %218 : vector<8x32xf32>
    %220 = vector.extract_strided_slice %200 {offsets = [0, 64], sizes = [8, 32], strides = [1, 1]} : vector<8x96xf32> to vector<8x32xf32>
    %221 = vector.extract_strided_slice %203 {offsets = [0, 64], sizes = [8, 32], strides = [1, 1]} : vector<8x96xf32> to vector<8x32xf32>
    %222 = arith.mulf %211, %221 : vector<8x32xf32>
    %223 = arith.addf %220, %222 : vector<8x32xf32>
    %224 = math.tanh %223 : vector<8x32xf32>
    %cst_37 = arith.constant 1.000000e+00 : f32
    %225 = vector.broadcast %cst_37 : f32 to vector<8x32xf32>
    %226 = arith.subf %225, %219 : vector<8x32xf32>
    %227 = arith.mulf %226, %224 : vector<8x32xf32>
    %228 = arith.mulf %219, %198 : vector<8x32xf32>
    %229 = arith.addf %227, %228 : vector<8x32xf32>
    %230 = vector.extract_strided_slice %9 {offsets = [7, 0, 0], sizes = [1, 8, 96], strides = [1, 1, 1]} : vector<16x8x96xf32> to vector<1x8x96xf32>
    %231 = vector.shape_cast %230 : vector<1x8x96xf32> to vector<8x96xf32>
    %cst_38 = arith.constant dense<0.000000e+00> : vector<8x96xf32>
    %232 = tpu.matmul %229, %10, %cst_38 {dimension_numbers = #tpu.dot_dimension_numbers<[1], [0], [0], [1], [0, 0, 1, 1], [], []>} : vector<8x32xf32>, vector<32x96xf32>, vector<8x96xf32> -> vector<8x96xf32>
    %233 = vector.broadcast %11 : vector<1x96xf32> to vector<8x96xf32>
    %234 = arith.addf %232, %233 : vector<8x96xf32>
    %235 = vector.extract_strided_slice %231 {offsets = [0, 0], sizes = [8, 32], strides = [1, 1]} : vector<8x96xf32> to vector<8x32xf32>
    %236 = vector.extract_strided_slice %234 {offsets = [0, 0], sizes = [8, 32], strides = [1, 1]} : vector<8x96xf32> to vector<8x32xf32>
    %237 = arith.addf %235, %236 : vector<8x32xf32>
    %238 = arith.negf %237 : vector<8x32xf32>
    %239 = math.exp %238 : vector<8x32xf32>
    %cst_39 = arith.constant 1.000000e+00 : f32
    %240 = vector.broadcast %cst_39 : f32 to vector<8x32xf32>
    %241 = arith.addf %240, %239 : vector<8x32xf32>
    %242 = arith.divf %240, %241 : vector<8x32xf32>
    %243 = vector.extract_strided_slice %231 {offsets = [0, 32], sizes = [8, 32], strides = [1, 1]} : vector<8x96xf32> to vector<8x32xf32>
    %244 = vector.extract_strided_slice %234 {offsets = [0, 32], sizes = [8, 32], strides = [1, 1]} : vector<8x96xf32> to vector<8x32xf32>
    %245 = arith.addf %243, %244 : vector<8x32xf32>
    %246 = arith.negf %245 : vector<8x32xf32>
    %247 = math.exp %246 : vector<8x32xf32>
    %cst_40 = arith.constant 1.000000e+00 : f32
    %248 = vector.broadcast %cst_40 : f32 to vector<8x32xf32>
    %249 = arith.addf %248, %247 : vector<8x32xf32>
    %250 = arith.divf %248, %249 : vector<8x32xf32>
    %251 = vector.extract_strided_slice %231 {offsets = [0, 64], sizes = [8, 32], strides = [1, 1]} : vector<8x96xf32> to vector<8x32xf32>
    %252 = vector.extract_strided_slice %234 {offsets = [0, 64], sizes = [8, 32], strides = [1, 1]} : vector<8x96xf32> to vector<8x32xf32>
    %253 = arith.mulf %242, %252 : vector<8x32xf32>
    %254 = arith.addf %251, %253 : vector<8x32xf32>
    %255 = math.tanh %254 : vector<8x32xf32>
    %cst_41 = arith.constant 1.000000e+00 : f32
    %256 = vector.broadcast %cst_41 : f32 to vector<8x32xf32>
    %257 = arith.subf %256, %250 : vector<8x32xf32>
    %258 = arith.mulf %257, %255 : vector<8x32xf32>
    %259 = arith.mulf %250, %229 : vector<8x32xf32>
    %260 = arith.addf %258, %259 : vector<8x32xf32>
    %261 = vector.extract_strided_slice %9 {offsets = [8, 0, 0], sizes = [1, 8, 96], strides = [1, 1, 1]} : vector<16x8x96xf32> to vector<1x8x96xf32>
    %262 = vector.shape_cast %261 : vector<1x8x96xf32> to vector<8x96xf32>
    %cst_42 = arith.constant dense<0.000000e+00> : vector<8x96xf32>
    %263 = tpu.matmul %260, %10, %cst_42 {dimension_numbers = #tpu.dot_dimension_numbers<[1], [0], [0], [1], [0, 0, 1, 1], [], []>} : vector<8x32xf32>, vector<32x96xf32>, vector<8x96xf32> -> vector<8x96xf32>
    %264 = vector.broadcast %11 : vector<1x96xf32> to vector<8x96xf32>
    %265 = arith.addf %263, %264 : vector<8x96xf32>
    %266 = vector.extract_strided_slice %262 {offsets = [0, 0], sizes = [8, 32], strides = [1, 1]} : vector<8x96xf32> to vector<8x32xf32>
    %267 = vector.extract_strided_slice %265 {offsets = [0, 0], sizes = [8, 32], strides = [1, 1]} : vector<8x96xf32> to vector<8x32xf32>
    %268 = arith.addf %266, %267 : vector<8x32xf32>
    %269 = arith.negf %268 : vector<8x32xf32>
    %270 = math.exp %269 : vector<8x32xf32>
    %cst_43 = arith.constant 1.000000e+00 : f32
    %271 = vector.broadcast %cst_43 : f32 to vector<8x32xf32>
    %272 = arith.addf %271, %270 : vector<8x32xf32>
    %273 = arith.divf %271, %272 : vector<8x32xf32>
    %274 = vector.extract_strided_slice %262 {offsets = [0, 32], sizes = [8, 32], strides = [1, 1]} : vector<8x96xf32> to vector<8x32xf32>
    %275 = vector.extract_strided_slice %265 {offsets = [0, 32], sizes = [8, 32], strides = [1, 1]} : vector<8x96xf32> to vector<8x32xf32>
    %276 = arith.addf %274, %275 : vector<8x32xf32>
    %277 = arith.negf %276 : vector<8x32xf32>
    %278 = math.exp %277 : vector<8x32xf32>
    %cst_44 = arith.constant 1.000000e+00 : f32
    %279 = vector.broadcast %cst_44 : f32 to vector<8x32xf32>
    %280 = arith.addf %279, %278 : vector<8x32xf32>
    %281 = arith.divf %279, %280 : vector<8x32xf32>
    %282 = vector.extract_strided_slice %262 {offsets = [0, 64], sizes = [8, 32], strides = [1, 1]} : vector<8x96xf32> to vector<8x32xf32>
    %283 = vector.extract_strided_slice %265 {offsets = [0, 64], sizes = [8, 32], strides = [1, 1]} : vector<8x96xf32> to vector<8x32xf32>
    %284 = arith.mulf %273, %283 : vector<8x32xf32>
    %285 = arith.addf %282, %284 : vector<8x32xf32>
    %286 = math.tanh %285 : vector<8x32xf32>
    %cst_45 = arith.constant 1.000000e+00 : f32
    %287 = vector.broadcast %cst_45 : f32 to vector<8x32xf32>
    %288 = arith.subf %287, %281 : vector<8x32xf32>
    %289 = arith.mulf %288, %286 : vector<8x32xf32>
    %290 = arith.mulf %281, %260 : vector<8x32xf32>
    %291 = arith.addf %289, %290 : vector<8x32xf32>
    %292 = vector.extract_strided_slice %9 {offsets = [9, 0, 0], sizes = [1, 8, 96], strides = [1, 1, 1]} : vector<16x8x96xf32> to vector<1x8x96xf32>
    %293 = vector.shape_cast %292 : vector<1x8x96xf32> to vector<8x96xf32>
    %cst_46 = arith.constant dense<0.000000e+00> : vector<8x96xf32>
    %294 = tpu.matmul %291, %10, %cst_46 {dimension_numbers = #tpu.dot_dimension_numbers<[1], [0], [0], [1], [0, 0, 1, 1], [], []>} : vector<8x32xf32>, vector<32x96xf32>, vector<8x96xf32> -> vector<8x96xf32>
    %295 = vector.broadcast %11 : vector<1x96xf32> to vector<8x96xf32>
    %296 = arith.addf %294, %295 : vector<8x96xf32>
    %297 = vector.extract_strided_slice %293 {offsets = [0, 0], sizes = [8, 32], strides = [1, 1]} : vector<8x96xf32> to vector<8x32xf32>
    %298 = vector.extract_strided_slice %296 {offsets = [0, 0], sizes = [8, 32], strides = [1, 1]} : vector<8x96xf32> to vector<8x32xf32>
    %299 = arith.addf %297, %298 : vector<8x32xf32>
    %300 = arith.negf %299 : vector<8x32xf32>
    %301 = math.exp %300 : vector<8x32xf32>
    %cst_47 = arith.constant 1.000000e+00 : f32
    %302 = vector.broadcast %cst_47 : f32 to vector<8x32xf32>
    %303 = arith.addf %302, %301 : vector<8x32xf32>
    %304 = arith.divf %302, %303 : vector<8x32xf32>
    %305 = vector.extract_strided_slice %293 {offsets = [0, 32], sizes = [8, 32], strides = [1, 1]} : vector<8x96xf32> to vector<8x32xf32>
    %306 = vector.extract_strided_slice %296 {offsets = [0, 32], sizes = [8, 32], strides = [1, 1]} : vector<8x96xf32> to vector<8x32xf32>
    %307 = arith.addf %305, %306 : vector<8x32xf32>
    %308 = arith.negf %307 : vector<8x32xf32>
    %309 = math.exp %308 : vector<8x32xf32>
    %cst_48 = arith.constant 1.000000e+00 : f32
    %310 = vector.broadcast %cst_48 : f32 to vector<8x32xf32>
    %311 = arith.addf %310, %309 : vector<8x32xf32>
    %312 = arith.divf %310, %311 : vector<8x32xf32>
    %313 = vector.extract_strided_slice %293 {offsets = [0, 64], sizes = [8, 32], strides = [1, 1]} : vector<8x96xf32> to vector<8x32xf32>
    %314 = vector.extract_strided_slice %296 {offsets = [0, 64], sizes = [8, 32], strides = [1, 1]} : vector<8x96xf32> to vector<8x32xf32>
    %315 = arith.mulf %304, %314 : vector<8x32xf32>
    %316 = arith.addf %313, %315 : vector<8x32xf32>
    %317 = math.tanh %316 : vector<8x32xf32>
    %cst_49 = arith.constant 1.000000e+00 : f32
    %318 = vector.broadcast %cst_49 : f32 to vector<8x32xf32>
    %319 = arith.subf %318, %312 : vector<8x32xf32>
    %320 = arith.mulf %319, %317 : vector<8x32xf32>
    %321 = arith.mulf %312, %291 : vector<8x32xf32>
    %322 = arith.addf %320, %321 : vector<8x32xf32>
    %323 = vector.extract_strided_slice %9 {offsets = [10, 0, 0], sizes = [1, 8, 96], strides = [1, 1, 1]} : vector<16x8x96xf32> to vector<1x8x96xf32>
    %324 = vector.shape_cast %323 : vector<1x8x96xf32> to vector<8x96xf32>
    %cst_50 = arith.constant dense<0.000000e+00> : vector<8x96xf32>
    %325 = tpu.matmul %322, %10, %cst_50 {dimension_numbers = #tpu.dot_dimension_numbers<[1], [0], [0], [1], [0, 0, 1, 1], [], []>} : vector<8x32xf32>, vector<32x96xf32>, vector<8x96xf32> -> vector<8x96xf32>
    %326 = vector.broadcast %11 : vector<1x96xf32> to vector<8x96xf32>
    %327 = arith.addf %325, %326 : vector<8x96xf32>
    %328 = vector.extract_strided_slice %324 {offsets = [0, 0], sizes = [8, 32], strides = [1, 1]} : vector<8x96xf32> to vector<8x32xf32>
    %329 = vector.extract_strided_slice %327 {offsets = [0, 0], sizes = [8, 32], strides = [1, 1]} : vector<8x96xf32> to vector<8x32xf32>
    %330 = arith.addf %328, %329 : vector<8x32xf32>
    %331 = arith.negf %330 : vector<8x32xf32>
    %332 = math.exp %331 : vector<8x32xf32>
    %cst_51 = arith.constant 1.000000e+00 : f32
    %333 = vector.broadcast %cst_51 : f32 to vector<8x32xf32>
    %334 = arith.addf %333, %332 : vector<8x32xf32>
    %335 = arith.divf %333, %334 : vector<8x32xf32>
    %336 = vector.extract_strided_slice %324 {offsets = [0, 32], sizes = [8, 32], strides = [1, 1]} : vector<8x96xf32> to vector<8x32xf32>
    %337 = vector.extract_strided_slice %327 {offsets = [0, 32], sizes = [8, 32], strides = [1, 1]} : vector<8x96xf32> to vector<8x32xf32>
    %338 = arith.addf %336, %337 : vector<8x32xf32>
    %339 = arith.negf %338 : vector<8x32xf32>
    %340 = math.exp %339 : vector<8x32xf32>
    %cst_52 = arith.constant 1.000000e+00 : f32
    %341 = vector.broadcast %cst_52 : f32 to vector<8x32xf32>
    %342 = arith.addf %341, %340 : vector<8x32xf32>
    %343 = arith.divf %341, %342 : vector<8x32xf32>
    %344 = vector.extract_strided_slice %324 {offsets = [0, 64], sizes = [8, 32], strides = [1, 1]} : vector<8x96xf32> to vector<8x32xf32>
    %345 = vector.extract_strided_slice %327 {offsets = [0, 64], sizes = [8, 32], strides = [1, 1]} : vector<8x96xf32> to vector<8x32xf32>
    %346 = arith.mulf %335, %345 : vector<8x32xf32>
    %347 = arith.addf %344, %346 : vector<8x32xf32>
    %348 = math.tanh %347 : vector<8x32xf32>
    %cst_53 = arith.constant 1.000000e+00 : f32
    %349 = vector.broadcast %cst_53 : f32 to vector<8x32xf32>
    %350 = arith.subf %349, %343 : vector<8x32xf32>
    %351 = arith.mulf %350, %348 : vector<8x32xf32>
    %352 = arith.mulf %343, %322 : vector<8x32xf32>
    %353 = arith.addf %351, %352 : vector<8x32xf32>
    %354 = vector.extract_strided_slice %9 {offsets = [11, 0, 0], sizes = [1, 8, 96], strides = [1, 1, 1]} : vector<16x8x96xf32> to vector<1x8x96xf32>
    %355 = vector.shape_cast %354 : vector<1x8x96xf32> to vector<8x96xf32>
    %cst_54 = arith.constant dense<0.000000e+00> : vector<8x96xf32>
    %356 = tpu.matmul %353, %10, %cst_54 {dimension_numbers = #tpu.dot_dimension_numbers<[1], [0], [0], [1], [0, 0, 1, 1], [], []>} : vector<8x32xf32>, vector<32x96xf32>, vector<8x96xf32> -> vector<8x96xf32>
    %357 = vector.broadcast %11 : vector<1x96xf32> to vector<8x96xf32>
    %358 = arith.addf %356, %357 : vector<8x96xf32>
    %359 = vector.extract_strided_slice %355 {offsets = [0, 0], sizes = [8, 32], strides = [1, 1]} : vector<8x96xf32> to vector<8x32xf32>
    %360 = vector.extract_strided_slice %358 {offsets = [0, 0], sizes = [8, 32], strides = [1, 1]} : vector<8x96xf32> to vector<8x32xf32>
    %361 = arith.addf %359, %360 : vector<8x32xf32>
    %362 = arith.negf %361 : vector<8x32xf32>
    %363 = math.exp %362 : vector<8x32xf32>
    %cst_55 = arith.constant 1.000000e+00 : f32
    %364 = vector.broadcast %cst_55 : f32 to vector<8x32xf32>
    %365 = arith.addf %364, %363 : vector<8x32xf32>
    %366 = arith.divf %364, %365 : vector<8x32xf32>
    %367 = vector.extract_strided_slice %355 {offsets = [0, 32], sizes = [8, 32], strides = [1, 1]} : vector<8x96xf32> to vector<8x32xf32>
    %368 = vector.extract_strided_slice %358 {offsets = [0, 32], sizes = [8, 32], strides = [1, 1]} : vector<8x96xf32> to vector<8x32xf32>
    %369 = arith.addf %367, %368 : vector<8x32xf32>
    %370 = arith.negf %369 : vector<8x32xf32>
    %371 = math.exp %370 : vector<8x32xf32>
    %cst_56 = arith.constant 1.000000e+00 : f32
    %372 = vector.broadcast %cst_56 : f32 to vector<8x32xf32>
    %373 = arith.addf %372, %371 : vector<8x32xf32>
    %374 = arith.divf %372, %373 : vector<8x32xf32>
    %375 = vector.extract_strided_slice %355 {offsets = [0, 64], sizes = [8, 32], strides = [1, 1]} : vector<8x96xf32> to vector<8x32xf32>
    %376 = vector.extract_strided_slice %358 {offsets = [0, 64], sizes = [8, 32], strides = [1, 1]} : vector<8x96xf32> to vector<8x32xf32>
    %377 = arith.mulf %366, %376 : vector<8x32xf32>
    %378 = arith.addf %375, %377 : vector<8x32xf32>
    %379 = math.tanh %378 : vector<8x32xf32>
    %cst_57 = arith.constant 1.000000e+00 : f32
    %380 = vector.broadcast %cst_57 : f32 to vector<8x32xf32>
    %381 = arith.subf %380, %374 : vector<8x32xf32>
    %382 = arith.mulf %381, %379 : vector<8x32xf32>
    %383 = arith.mulf %374, %353 : vector<8x32xf32>
    %384 = arith.addf %382, %383 : vector<8x32xf32>
    %385 = vector.extract_strided_slice %9 {offsets = [12, 0, 0], sizes = [1, 8, 96], strides = [1, 1, 1]} : vector<16x8x96xf32> to vector<1x8x96xf32>
    %386 = vector.shape_cast %385 : vector<1x8x96xf32> to vector<8x96xf32>
    %cst_58 = arith.constant dense<0.000000e+00> : vector<8x96xf32>
    %387 = tpu.matmul %384, %10, %cst_58 {dimension_numbers = #tpu.dot_dimension_numbers<[1], [0], [0], [1], [0, 0, 1, 1], [], []>} : vector<8x32xf32>, vector<32x96xf32>, vector<8x96xf32> -> vector<8x96xf32>
    %388 = vector.broadcast %11 : vector<1x96xf32> to vector<8x96xf32>
    %389 = arith.addf %387, %388 : vector<8x96xf32>
    %390 = vector.extract_strided_slice %386 {offsets = [0, 0], sizes = [8, 32], strides = [1, 1]} : vector<8x96xf32> to vector<8x32xf32>
    %391 = vector.extract_strided_slice %389 {offsets = [0, 0], sizes = [8, 32], strides = [1, 1]} : vector<8x96xf32> to vector<8x32xf32>
    %392 = arith.addf %390, %391 : vector<8x32xf32>
    %393 = arith.negf %392 : vector<8x32xf32>
    %394 = math.exp %393 : vector<8x32xf32>
    %cst_59 = arith.constant 1.000000e+00 : f32
    %395 = vector.broadcast %cst_59 : f32 to vector<8x32xf32>
    %396 = arith.addf %395, %394 : vector<8x32xf32>
    %397 = arith.divf %395, %396 : vector<8x32xf32>
    %398 = vector.extract_strided_slice %386 {offsets = [0, 32], sizes = [8, 32], strides = [1, 1]} : vector<8x96xf32> to vector<8x32xf32>
    %399 = vector.extract_strided_slice %389 {offsets = [0, 32], sizes = [8, 32], strides = [1, 1]} : vector<8x96xf32> to vector<8x32xf32>
    %400 = arith.addf %398, %399 : vector<8x32xf32>
    %401 = arith.negf %400 : vector<8x32xf32>
    %402 = math.exp %401 : vector<8x32xf32>
    %cst_60 = arith.constant 1.000000e+00 : f32
    %403 = vector.broadcast %cst_60 : f32 to vector<8x32xf32>
    %404 = arith.addf %403, %402 : vector<8x32xf32>
    %405 = arith.divf %403, %404 : vector<8x32xf32>
    %406 = vector.extract_strided_slice %386 {offsets = [0, 64], sizes = [8, 32], strides = [1, 1]} : vector<8x96xf32> to vector<8x32xf32>
    %407 = vector.extract_strided_slice %389 {offsets = [0, 64], sizes = [8, 32], strides = [1, 1]} : vector<8x96xf32> to vector<8x32xf32>
    %408 = arith.mulf %397, %407 : vector<8x32xf32>
    %409 = arith.addf %406, %408 : vector<8x32xf32>
    %410 = math.tanh %409 : vector<8x32xf32>
    %cst_61 = arith.constant 1.000000e+00 : f32
    %411 = vector.broadcast %cst_61 : f32 to vector<8x32xf32>
    %412 = arith.subf %411, %405 : vector<8x32xf32>
    %413 = arith.mulf %412, %410 : vector<8x32xf32>
    %414 = arith.mulf %405, %384 : vector<8x32xf32>
    %415 = arith.addf %413, %414 : vector<8x32xf32>
    %416 = vector.extract_strided_slice %9 {offsets = [13, 0, 0], sizes = [1, 8, 96], strides = [1, 1, 1]} : vector<16x8x96xf32> to vector<1x8x96xf32>
    %417 = vector.shape_cast %416 : vector<1x8x96xf32> to vector<8x96xf32>
    %cst_62 = arith.constant dense<0.000000e+00> : vector<8x96xf32>
    %418 = tpu.matmul %415, %10, %cst_62 {dimension_numbers = #tpu.dot_dimension_numbers<[1], [0], [0], [1], [0, 0, 1, 1], [], []>} : vector<8x32xf32>, vector<32x96xf32>, vector<8x96xf32> -> vector<8x96xf32>
    %419 = vector.broadcast %11 : vector<1x96xf32> to vector<8x96xf32>
    %420 = arith.addf %418, %419 : vector<8x96xf32>
    %421 = vector.extract_strided_slice %417 {offsets = [0, 0], sizes = [8, 32], strides = [1, 1]} : vector<8x96xf32> to vector<8x32xf32>
    %422 = vector.extract_strided_slice %420 {offsets = [0, 0], sizes = [8, 32], strides = [1, 1]} : vector<8x96xf32> to vector<8x32xf32>
    %423 = arith.addf %421, %422 : vector<8x32xf32>
    %424 = arith.negf %423 : vector<8x32xf32>
    %425 = math.exp %424 : vector<8x32xf32>
    %cst_63 = arith.constant 1.000000e+00 : f32
    %426 = vector.broadcast %cst_63 : f32 to vector<8x32xf32>
    %427 = arith.addf %426, %425 : vector<8x32xf32>
    %428 = arith.divf %426, %427 : vector<8x32xf32>
    %429 = vector.extract_strided_slice %417 {offsets = [0, 32], sizes = [8, 32], strides = [1, 1]} : vector<8x96xf32> to vector<8x32xf32>
    %430 = vector.extract_strided_slice %420 {offsets = [0, 32], sizes = [8, 32], strides = [1, 1]} : vector<8x96xf32> to vector<8x32xf32>
    %431 = arith.addf %429, %430 : vector<8x32xf32>
    %432 = arith.negf %431 : vector<8x32xf32>
    %433 = math.exp %432 : vector<8x32xf32>
    %cst_64 = arith.constant 1.000000e+00 : f32
    %434 = vector.broadcast %cst_64 : f32 to vector<8x32xf32>
    %435 = arith.addf %434, %433 : vector<8x32xf32>
    %436 = arith.divf %434, %435 : vector<8x32xf32>
    %437 = vector.extract_strided_slice %417 {offsets = [0, 64], sizes = [8, 32], strides = [1, 1]} : vector<8x96xf32> to vector<8x32xf32>
    %438 = vector.extract_strided_slice %420 {offsets = [0, 64], sizes = [8, 32], strides = [1, 1]} : vector<8x96xf32> to vector<8x32xf32>
    %439 = arith.mulf %428, %438 : vector<8x32xf32>
    %440 = arith.addf %437, %439 : vector<8x32xf32>
    %441 = math.tanh %440 : vector<8x32xf32>
    %cst_65 = arith.constant 1.000000e+00 : f32
    %442 = vector.broadcast %cst_65 : f32 to vector<8x32xf32>
    %443 = arith.subf %442, %436 : vector<8x32xf32>
    %444 = arith.mulf %443, %441 : vector<8x32xf32>
    %445 = arith.mulf %436, %415 : vector<8x32xf32>
    %446 = arith.addf %444, %445 : vector<8x32xf32>
    %447 = vector.extract_strided_slice %9 {offsets = [14, 0, 0], sizes = [1, 8, 96], strides = [1, 1, 1]} : vector<16x8x96xf32> to vector<1x8x96xf32>
    %448 = vector.shape_cast %447 : vector<1x8x96xf32> to vector<8x96xf32>
    %cst_66 = arith.constant dense<0.000000e+00> : vector<8x96xf32>
    %449 = tpu.matmul %446, %10, %cst_66 {dimension_numbers = #tpu.dot_dimension_numbers<[1], [0], [0], [1], [0, 0, 1, 1], [], []>} : vector<8x32xf32>, vector<32x96xf32>, vector<8x96xf32> -> vector<8x96xf32>
    %450 = vector.broadcast %11 : vector<1x96xf32> to vector<8x96xf32>
    %451 = arith.addf %449, %450 : vector<8x96xf32>
    %452 = vector.extract_strided_slice %448 {offsets = [0, 0], sizes = [8, 32], strides = [1, 1]} : vector<8x96xf32> to vector<8x32xf32>
    %453 = vector.extract_strided_slice %451 {offsets = [0, 0], sizes = [8, 32], strides = [1, 1]} : vector<8x96xf32> to vector<8x32xf32>
    %454 = arith.addf %452, %453 : vector<8x32xf32>
    %455 = arith.negf %454 : vector<8x32xf32>
    %456 = math.exp %455 : vector<8x32xf32>
    %cst_67 = arith.constant 1.000000e+00 : f32
    %457 = vector.broadcast %cst_67 : f32 to vector<8x32xf32>
    %458 = arith.addf %457, %456 : vector<8x32xf32>
    %459 = arith.divf %457, %458 : vector<8x32xf32>
    %460 = vector.extract_strided_slice %448 {offsets = [0, 32], sizes = [8, 32], strides = [1, 1]} : vector<8x96xf32> to vector<8x32xf32>
    %461 = vector.extract_strided_slice %451 {offsets = [0, 32], sizes = [8, 32], strides = [1, 1]} : vector<8x96xf32> to vector<8x32xf32>
    %462 = arith.addf %460, %461 : vector<8x32xf32>
    %463 = arith.negf %462 : vector<8x32xf32>
    %464 = math.exp %463 : vector<8x32xf32>
    %cst_68 = arith.constant 1.000000e+00 : f32
    %465 = vector.broadcast %cst_68 : f32 to vector<8x32xf32>
    %466 = arith.addf %465, %464 : vector<8x32xf32>
    %467 = arith.divf %465, %466 : vector<8x32xf32>
    %468 = vector.extract_strided_slice %448 {offsets = [0, 64], sizes = [8, 32], strides = [1, 1]} : vector<8x96xf32> to vector<8x32xf32>
    %469 = vector.extract_strided_slice %451 {offsets = [0, 64], sizes = [8, 32], strides = [1, 1]} : vector<8x96xf32> to vector<8x32xf32>
    %470 = arith.mulf %459, %469 : vector<8x32xf32>
    %471 = arith.addf %468, %470 : vector<8x32xf32>
    %472 = math.tanh %471 : vector<8x32xf32>
    %cst_69 = arith.constant 1.000000e+00 : f32
    %473 = vector.broadcast %cst_69 : f32 to vector<8x32xf32>
    %474 = arith.subf %473, %467 : vector<8x32xf32>
    %475 = arith.mulf %474, %472 : vector<8x32xf32>
    %476 = arith.mulf %467, %446 : vector<8x32xf32>
    %477 = arith.addf %475, %476 : vector<8x32xf32>
    %478 = vector.extract_strided_slice %9 {offsets = [15, 0, 0], sizes = [1, 8, 96], strides = [1, 1, 1]} : vector<16x8x96xf32> to vector<1x8x96xf32>
    %479 = vector.shape_cast %478 : vector<1x8x96xf32> to vector<8x96xf32>
    %cst_70 = arith.constant dense<0.000000e+00> : vector<8x96xf32>
    %480 = tpu.matmul %477, %10, %cst_70 {dimension_numbers = #tpu.dot_dimension_numbers<[1], [0], [0], [1], [0, 0, 1, 1], [], []>} : vector<8x32xf32>, vector<32x96xf32>, vector<8x96xf32> -> vector<8x96xf32>
    %481 = vector.broadcast %11 : vector<1x96xf32> to vector<8x96xf32>
    %482 = arith.addf %480, %481 : vector<8x96xf32>
    %483 = vector.extract_strided_slice %479 {offsets = [0, 0], sizes = [8, 32], strides = [1, 1]} : vector<8x96xf32> to vector<8x32xf32>
    %484 = vector.extract_strided_slice %482 {offsets = [0, 0], sizes = [8, 32], strides = [1, 1]} : vector<8x96xf32> to vector<8x32xf32>
    %485 = arith.addf %483, %484 : vector<8x32xf32>
    %486 = arith.negf %485 : vector<8x32xf32>
    %487 = math.exp %486 : vector<8x32xf32>
    %cst_71 = arith.constant 1.000000e+00 : f32
    %488 = vector.broadcast %cst_71 : f32 to vector<8x32xf32>
    %489 = arith.addf %488, %487 : vector<8x32xf32>
    %490 = arith.divf %488, %489 : vector<8x32xf32>
    %491 = vector.extract_strided_slice %479 {offsets = [0, 32], sizes = [8, 32], strides = [1, 1]} : vector<8x96xf32> to vector<8x32xf32>
    %492 = vector.extract_strided_slice %482 {offsets = [0, 32], sizes = [8, 32], strides = [1, 1]} : vector<8x96xf32> to vector<8x32xf32>
    %493 = arith.addf %491, %492 : vector<8x32xf32>
    %494 = arith.negf %493 : vector<8x32xf32>
    %495 = math.exp %494 : vector<8x32xf32>
    %cst_72 = arith.constant 1.000000e+00 : f32
    %496 = vector.broadcast %cst_72 : f32 to vector<8x32xf32>
    %497 = arith.addf %496, %495 : vector<8x32xf32>
    %498 = arith.divf %496, %497 : vector<8x32xf32>
    %499 = vector.extract_strided_slice %479 {offsets = [0, 64], sizes = [8, 32], strides = [1, 1]} : vector<8x96xf32> to vector<8x32xf32>
    %500 = vector.extract_strided_slice %482 {offsets = [0, 64], sizes = [8, 32], strides = [1, 1]} : vector<8x96xf32> to vector<8x32xf32>
    %501 = arith.mulf %490, %500 : vector<8x32xf32>
    %502 = arith.addf %499, %501 : vector<8x32xf32>
    %503 = math.tanh %502 : vector<8x32xf32>
    %cst_73 = arith.constant 1.000000e+00 : f32
    %504 = vector.broadcast %cst_73 : f32 to vector<8x32xf32>
    %505 = arith.subf %504, %498 : vector<8x32xf32>
    %506 = arith.mulf %505, %503 : vector<8x32xf32>
    %507 = arith.mulf %498, %477 : vector<8x32xf32>
    %508 = arith.addf %506, %507 : vector<8x32xf32>
    %c0_74 = arith.constant 0 : index
    %c0_75 = arith.constant 0 : index
    %509 = vector.load %arg5[%c0_74, %c0_75] : memref<1x32xf32, #tpu.memory_space<vmem>>, vector<1x32xf32>
    %510 = vector.broadcast %509 : vector<1x32xf32> to vector<8x32xf32>
    %511 = arith.mulf %508, %510 : vector<8x32xf32>
    %cst_76 = arith.constant dense<0.000000e+00> : vector<8xf32>
    %512 = vector.multi_reduction <add>, %511, %cst_76 [1] : vector<8x32xf32> to vector<8xf32>
    %513 = vector.shape_cast %512 : vector<8xf32> to vector<8x1xf32>
    %c0_77 = arith.constant 0 : index
    %c0_78 = arith.constant 0 : index
    %514 = vector.load %arg6[%c0_77, %c0_78] : memref<1x1xf32, #tpu.memory_space<vmem>>, vector<1x1xf32>
    %515 = vector.broadcast %514 : vector<1x1xf32> to vector<8x1xf32>
    %516 = arith.addf %513, %515 : vector<8x1xf32>
    %517 = arith.negf %516 : vector<8x1xf32>
    %518 = math.exp %517 : vector<8x1xf32>
    %cst_79 = arith.constant 1.000000e+00 : f32
    %519 = vector.broadcast %cst_79 : f32 to vector<8x1xf32>
    %520 = arith.addf %519, %518 : vector<8x1xf32>
    %521 = arith.divf %519, %520 : vector<8x1xf32>
    %c0_80 = arith.constant 0 : index
    %c0_81 = arith.constant 0 : index
    %522 = vector.load %arg7[%c0_80, %c0_81] : memref<8x1xf32, #tpu.memory_space<vmem>>, vector<8x1xf32>
    tpu.vector_store %arg7[%c0_80, %c0_81], %521 {strides = array<i32>} : memref<8x1xf32, #tpu.memory_space<vmem>>, vector<8x1xf32>,
    return
  }
}

</mosaic_0001>

<llo_original>
// kernel: tpu_custom_call.1
$region0: #{tpu_custom_call.1}
  #allocation0 [shape = 'u32[]', space=smem, size = 0x4, offset = 0x4, fixed_abs, tag = 'smem constant byte address 0x4 - core index']
  #allocation1 [shape = 'u32[144,128]{1,0:T(1,128)}', space=vmem, size = 0x12000, scoped, tag = 'internal scratch']
  #allocation2 [shape = 'f32[1,1]{1,0:T(1,128)S(1)}', space=vmem, size = 0x200, scoped, tag = 'scoped memory for tpu_custom_call.1']
  %s0 = inlined_call_operand.vmem [shape: f32[16,8,1], index: 0, kind: input, shape index: {}]
  %s1 = inlined_call_operand.vmem [shape: f32[1,96], index: 1, kind: input, shape index: {}]
  %s2 = inlined_call_operand.vmem [shape: f32[32,96], index: 2, kind: input, shape index: {}]
  %s3 = inlined_call_operand.vmem [shape: f32[1,96], index: 3, kind: input, shape index: {}]
  %s4 = inlined_call_operand.vmem [shape: f32[1,96], index: 4, kind: input, shape index: {}]
  %s5 = inlined_call_operand.vmem [shape: f32[1,32], index: 5, kind: input, shape index: {}]
  %s6 = inlined_call_operand.<no memory space> [shape: f32[1,1], index: 6, kind: input, shape index: {}]
  %s7 = inlined_call_operand.vmem [shape: f32[8,1], index: 7, kind: output, shape index: {}]
  %s8 = sld [smem:[#allocation0]]
  $region38: #{tpu_custom_call.1} parent=0
    _
  %s10 = ssub.s32 1, %s8
  %s11 = scalar_select 0, %s10, %s8
  %v12 = vstv %s6
  %13 = vst [vmem:[#allocation2] sm:$0x1] %v12
  // Predicated region
  $region2: #{tpu_custom_call.1} parent=0 // pred_check
    _
  $region3: #{tpu_custom_call.1} parent=0 // pred_check_branch
    %15 = sbr.rel (0) target = $region5
  $region4: #{tpu_custom_call.1} parent=0 // pred_region
    _
  $region5: #{tpu_custom_call.1} parent=0 // pred_fallthru
    _
  // Predicated region
  $region6: #{tpu_custom_call.1} parent=0 // pred_check
    _
  $region7: #{tpu_custom_call.1} parent=0 // pred_check_branch
    %17 = sbr.rel (0) target = $region9
  $region8: #{tpu_custom_call.1} parent=0 // pred_region
    _
  $region9: #{tpu_custom_call.1} parent=0 // pred_fallthru
    _
  // Predicated region
  $region10: #{tpu_custom_call.1} parent=0 // pred_check
    _
  $region11: #{tpu_custom_call.1} parent=0 // pred_check_branch
    %19 = sbr.rel (0) target = $region13
  $region12: #{tpu_custom_call.1} parent=0 // pred_region
    _
  $region13: #{tpu_custom_call.1} parent=0 // pred_fallthru
    _
  // Predicated region
  $region14: #{tpu_custom_call.1} parent=0 // pred_check
    _
  $region15: #{tpu_custom_call.1} parent=0 // pred_check_branch
    %21 = sbr.rel (0) target = $region17
  $region16: #{tpu_custom_call.1} parent=0 // pred_region
    _
  $region17: #{tpu_custom_call.1} parent=0 // pred_fallthru
    _
  // Predicated region
  $region18: #{tpu_custom_call.1} parent=0 // pred_check
    _
  $region19: #{tpu_custom_call.1} parent=0 // pred_check_branch
    %23 = sbr.rel (0) target = $region21
  $region20: #{tpu_custom_call.1} parent=0 // pred_region
    _
  $region21: #{tpu_custom_call.1} parent=0 // pred_fallthru
    _
  // Predicated region
  $region22: #{tpu_custom_call.1} parent=0 // pred_check
    _
  $region23: #{tpu_custom_call.1} parent=0 // pred_check_branch
    %25 = sbr.rel (0) target = $region25
  $region24: #{tpu_custom_call.1} parent=0 // pred_region
    _
  $region25: #{tpu_custom_call.1} parent=0 // pred_fallthru
    _
  // Predicated region
  $region26: #{tpu_custom_call.1} parent=0 // pred_check
    _
  $region27: #{tpu_custom_call.1} parent=0 // pred_check_branch
    %27 = sbr.rel (0) target = $region29
  $region28: #{tpu_custom_call.1} parent=0 // pred_region
    _
  $region29: #{tpu_custom_call.1} parent=0 // pred_fallthru
    _
  %v28 = vld [vmem:[%s0] sm:$0xff]
  %v29 = vld [vmem:[%s0 + $0x8] sm:$0xff]
  %v30 = vld [vmem:[%s0 + $0x10] sm:$0xff]
  %v31 = vld [vmem:[%s0 + $0x18] sm:$0xff]
  %v32 = vld [vmem:[%s0 + $0x20] sm:$0xff]
  %v33 = vld [vmem:[%s0 + $0x28] sm:$0xff]
  %v34 = vld [vmem:[%s0 + $0x30] sm:$0xff]
  %v35 = vld [vmem:[%s0 + $0x38] sm:$0xff]
  %v36 = vld [vmem:[%s0 + $0x40] sm:$0xff]
  %v37 = vld [vmem:[%s0 + $0x48] sm:$0xff]
  %v38 = vld [vmem:[%s0 + $0x50] sm:$0xff]
  %v39 = vld [vmem:[%s0 + $0x58] sm:$0xff]
  %v40 = vld [vmem:[%s0 + $0x60] sm:$0xff]
  %v41 = vld [vmem:[%s0 + $0x68] sm:$0xff]
  %v42 = vld [vmem:[%s0 + $0x70] sm:$0xff]
  %v43 = vld [vmem:[%s0 + $0x78] sm:$0xff]
  %v44 = vld [vmem:[%s1] sm:$0x1]
  %v45 = vld [vmem:[%s3] sm:$0x1]
  %47 = vset.pattern.permute.xlu0 0
  %48 = vperm.xlu0 %47, %v28
  %v49 = vpop.permute.xlu0 %48
  %52 = vset.pattern.permute.xlu0 0
  %53 = vperm.xlu0 %52, %v29
  %v54 = vpop.permute.xlu0 %53
  %57 = vset.pattern.permute.xlu0 0
  %58 = vperm.xlu0 %57, %v30
  %v59 = vpop.permute.xlu0 %58
  %62 = vset.pattern.permute.xlu0 0
  %63 = vperm.xlu0 %62, %v31
  %v64 = vpop.permute.xlu0 %63
  %67 = vset.pattern.permute.xlu0 0
  %68 = vperm.xlu0 %67, %v32
  %v69 = vpop.permute.xlu0 %68
  %72 = vset.pattern.permute.xlu0 0
  %73 = vperm.xlu0 %72, %v33
  %v74 = vpop.permute.xlu0 %73
  %77 = vset.pattern.permute.xlu0 0
  %78 = vperm.xlu0 %77, %v34
  %v79 = vpop.permute.xlu0 %78
  %82 = vset.pattern.permute.xlu0 0
  %83 = vperm.xlu0 %82, %v35
  %v84 = vpop.permute.xlu0 %83
  %87 = vset.pattern.permute.xlu0 0
  %88 = vperm.xlu0 %87, %v36
  %v89 = vpop.permute.xlu0 %88
  %92 = vset.pattern.permute.xlu0 0
  %93 = vperm.xlu0 %92, %v37
  %v94 = vpop.permute.xlu0 %93
  %97 = vset.pattern.permute.xlu0 0
  %98 = vperm.xlu0 %97, %v38
  %v99 = vpop.permute.xlu0 %98
  %102 = vset.pattern.permute.xlu0 0
  %103 = vperm.xlu0 %102, %v39
  %v104 = vpop.permute.xlu0 %103
  %107 = vset.pattern.permute.xlu0 0
  %108 = vperm.xlu0 %107, %v40
  %v109 = vpop.permute.xlu0 %108
  %112 = vset.pattern.permute.xlu0 0
  %113 = vperm.xlu0 %112, %v41
  %v114 = vpop.permute.xlu0 %113
  %117 = vset.pattern.permute.xlu0 0
  %118 = vperm.xlu0 %117, %v42
  %v119 = vpop.permute.xlu0 %118
  %122 = vset.pattern.permute.xlu0 0
  %123 = vperm.xlu0 %122, %v43
  %v124 = vpop.permute.xlu0 %123
  %v127 = vlaneseq
  %v128 = vshrl.u32 %v127, 7
  %v129 = vsub.s32 0, %v128
  %v130 = vrot.slane %v44, %v129
  %v132 = vmul.f32 %v49, %v130
  %v133 = vmul.f32 %v54, %v130
  %v134 = vmul.f32 %v59, %v130
  %v135 = vmul.f32 %v64, %v130
  %v136 = vmul.f32 %v69, %v130
  %v137 = vmul.f32 %v74, %v130
  %v138 = vmul.f32 %v79, %v130
  %v139 = vmul.f32 %v84, %v130
  %v140 = vmul.f32 %v89, %v130
  %v141 = vmul.f32 %v94, %v130
  %v142 = vmul.f32 %v99, %v130
  %v143 = vmul.f32 %v104, %v130
  %v144 = vmul.f32 %v109, %v130
  %v145 = vmul.f32 %v114, %v130
  %v146 = vmul.f32 %v119, %v130
  %v147 = vmul.f32 %v124, %v130
  %v149 = vlaneseq
  %v150 = vshrl.u32 %v149, 7
  %v151 = vsub.s32 0, %v150
  %v152 = vrot.slane %v45, %v151
  %v154 = vadd.f32 %v132, %v152
  %v155 = vadd.f32 %v133, %v152
  %v156 = vadd.f32 %v134, %v152
  %v157 = vadd.f32 %v135, %v152
  %v158 = vadd.f32 %v136, %v152
  %v159 = vadd.f32 %v137, %v152
  %v160 = vadd.f32 %v138, %v152
  %v161 = vadd.f32 %v139, %v152
  %v162 = vadd.f32 %v140, %v152
  %v163 = vadd.f32 %v141, %v152
  %v164 = vadd.f32 %v142, %v152
  %v165 = vadd.f32 %v143, %v152
  %v166 = vadd.f32 %v144, %v152
  %v167 = vadd.f32 %v145, %v152
  %v168 = vadd.f32 %v146, %v152
  %v169 = vadd.f32 %v147, %v152
  %v170 = vld [vmem:[%s2] sm:$0xff]
  %v171 = vld [vmem:[%s2 + $0x8] sm:$0xff]
  %v172 = vld [vmem:[%s2 + $0x10] sm:$0xff]
  %v173 = vld [vmem:[%s2 + $0x18] sm:$0xff]
  %v174 = vld [vmem:[%s4] sm:$0x1]
  %v176 = vlaneseq
  %v177 = vshrl.u32 %v176, 7
  %v178 = vsub.s32 0, %v177
  %v179 = vrot.slane %v174, %v178
  %vm181 = vcmask 261120
  %v183 = vsel %vm181, 0.0, 0
  %185 = vmatprep.subr.mxu0 0.0
  %186 = vmatpush1.msra.mxu0 %v170
  %187 = vmatprep.subr.mxu0 0.0
  %188 = vmatpush1.msra.mxu0 %v171
  %189 = vmatprep.subr.mxu0 0.0
  %190 = vmatpush1.msra.mxu0 %v172
  %191 = vmatprep.subr.mxu0 0.0
  %192 = vmatpush1.msra.mxu0 %v173
  %193 = vmatprep.subr.mxu0 0.0
  %194 = vmatpush1.msra.mxu0 0.0
  %195 = vmatprep.subr.mxu0 0.0
  %196 = vmatpush1.msra.mxu0 0.0
  %197 = vmatprep.subr.mxu0 0.0
  %198 = vmatpush1.msra.mxu0 0.0
  %199 = vmatprep.subr.mxu0 0.0
  %200 = vmatpush1.msra.mxu0 0.0
  %201 = vmatprep.subr.mxu0 0.0
  %202 = vmatpush1.msra.mxu0 0.0
  %203 = vmatprep.subr.mxu0 0.0
  %204 = vmatpush1.msra.mxu0 0.0
  %205 = vmatprep.subr.mxu0 0.0
  %206 = vmatpush1.msra.mxu0 0.0
  %207 = vmatprep.subr.mxu0 0.0
  %208 = vmatpush1.msra.mxu0 0.0
  %209 = vmatprep.subr.mxu0 0.0
  %210 = vmatpush1.msra.mxu0 0.0
  %211 = vmatprep.subr.mxu0 0.0
  %212 = vmatpush1.msra.mxu0 0.0
  %213 = vmatprep.subr.mxu0 0.0
  %214 = vmatpush1.msra.mxu0 0.0
  %215 = vmatprep.subr.mxu0 0.0
  %216 = vmatpush1.msra.mxu0 0.0
  %217 = vmatprep.subr.mxu0 0.0
  %218 = vmatpush1.msra.mxu0 0.0
  %219 = vmatprep.subr.mxu0 0.0
  %220 = vmatpush1.msra.mxu0 0.0
  %221 = vmatprep.subr.mxu0 0.0
  %222 = vmatpush1.msra.mxu0 0.0
  %223 = vmatprep.subr.mxu0 0.0
  %224 = vmatpush1.msra.mxu0 0.0
  %225 = vmatprep.subr.mxu0 0.0
  %226 = vmatpush1.msra.mxu0 0.0
  %227 = vmatprep.subr.mxu0 0.0
  %228 = vmatpush1.msra.mxu0 0.0
  %229 = vmatprep.subr.mxu0 0.0
  %230 = vmatpush1.msra.mxu0 0.0
  %231 = vmatprep.subr.mxu0 0.0
  %232 = vmatpush1.msra.mxu0 0.0
  %233 = vmatprep.subr.mxu0 0.0
  %234 = vmatpush1.msra.mxu0 0.0
  %235 = vmatprep.subr.mxu0 0.0
  %236 = vmatpush1.msra.mxu0 0.0
  %237 = vmatprep.subr.mxu0 0.0
  %238 = vmatpush1.msra.mxu0 0.0
  %239 = vmatprep.subr.mxu0 0.0
  %240 = vmatpush1.msra.mxu0 0.0
  %241 = vmatprep.subr.mxu0 0.0
  %242 = vmatpush1.msra.mxu0 0.0
  %243 = vmatprep.subr.mxu0 0.0
  %244 = vmatpush1.msra.mxu0 0.0
  %245 = vmatprep.subr.mxu0 0.0
  %246 = vmatpush1.msra.mxu0 0.0
  %247 = vmatprep.subr.mxu0 0.0
  %248 = vmatpush1.msra.mxu0 0.0
  %249 = vmatprep.mubr.f32.mxu0 0.0
  %250 = vmatmul.mubr.f32.gmra.mrb[0].mxu0 %v183
  %v251 = vpop.f32.mrb[0].mxu0
  %v252 = vadd.f32 %v179, %v251
  %v253 = vpop.f32.mrb[0].mxu0
  %254 = vdwg.mxu0
  %v255 = vadd.f32 %v154, %v252
  %v256 = vxor.u32 %v255, 2147483648
  %v257 = vmul.f32 %v256, 1.442695
  %v258 = vpow.pop %v257
  %v259 = vadd.f32 %v258, 1.0
  %v260 = vrcp.pop %v259
  %v261 = vmul.f32 1.0, %v260
  %263 = vrot.lane.b32.xlu0 %v252, 64
  %v264 = vpop.permute.xlu0 %263
  %v266 = vmul.f32 %v261, %v264
  %268 = vrot.lane.b32.xlu0 %v266, 64
  %v269 = vpop.permute.xlu0 %268
  %v271 = vadd.f32 %v154, %v269
  %v272 = vtanh.pop %v271
  %v273 = vsub.f32 1.0, %v261
  %275 = vrot.lane.b32.xlu0 %v272, 96
  %v276 = vpop.permute.xlu0 %275
  %v278 = vmul.f32 %v273, %v276
  %v279 = vmul.f32 %v261, 0.0
  %v280 = vadd.f32 %v278, %v279
  %282 = vrot.lane.b32.xlu0 %v280, 96
  %v283 = vpop.permute.xlu0 %282
  %v284 = vsel %vm181, %v283, 0
  %286 = vmatprep.subr.mxu0 0.0
  %287 = vmatpush1.msra.mxu0 %v170
  %288 = vmatprep.subr.mxu0 0.0
  %289 = vmatpush1.msra.mxu0 %v171
  %290 = vmatprep.subr.mxu0 0.0
  %291 = vmatpush1.msra.mxu0 %v172
  %292 = vmatprep.subr.mxu0 0.0
  %293 = vmatpush1.msra.mxu0 %v173
  %294 = vmatprep.subr.mxu0 0.0
  %295 = vmatpush1.msra.mxu0 0.0
  %296 = vmatprep.subr.mxu0 0.0
  %297 = vmatpush1.msra.mxu0 0.0
  %298 = vmatprep.subr.mxu0 0.0
  %299 = vmatpush1.msra.mxu0 0.0
  %300 = vmatprep.subr.mxu0 0.0
  %301 = vmatpush1.msra.mxu0 0.0
  %302 = vmatprep.subr.mxu0 0.0
  %303 = vmatpush1.msra.mxu0 0.0
  %304 = vmatprep.subr.mxu0 0.0
  %305 = vmatpush1.msra.mxu0 0.0
  %306 = vmatprep.subr.mxu0 0.0
  %307 = vmatpush1.msra.mxu0 0.0
  %308 = vmatprep.subr.mxu0 0.0
  %309 = vmatpush1.msra.mxu0 0.0
  %310 = vmatprep.subr.mxu0 0.0
  %311 = vmatpush1.msra.mxu0 0.0
  %312 = vmatprep.subr.mxu0 0.0
  %313 = vmatpush1.msra.mxu0 0.0
  %314 = vmatprep.subr.mxu0 0.0
  %315 = vmatpush1.msra.mxu0 0.0
  %316 = vmatprep.subr.mxu0 0.0
  %317 = vmatpush1.msra.mxu0 0.0
  %318 = vmatprep.subr.mxu0 0.0
  %319 = vmatpush1.msra.mxu0 0.0
  %320 = vmatprep.subr.mxu0 0.0
  %321 = vmatpush1.msra.mxu0 0.0
  %322 = vmatprep.subr.mxu0 0.0
  %323 = vmatpush1.msra.mxu0 0.0
  %324 = vmatprep.subr.mxu0 0.0
  %325 = vmatpush1.msra.mxu0 0.0
  %326 = vmatprep.subr.mxu0 0.0
  %327 = vmatpush1.msra.mxu0 0.0
  %328 = vmatprep.subr.mxu0 0.0
  %329 = vmatpush1.msra.mxu0 0.0
  %330 = vmatprep.subr.mxu0 0.0
  %331 = vmatpush1.msra.mxu0 0.0
  %332 = vmatprep.subr.mxu0 0.0
  %333 = vmatpush1.msra.mxu0 0.0
  %334 = vmatprep.subr.mxu0 0.0
  %335 = vmatpush1.msra.mxu0 0.0
  %336 = vmatprep.subr.mxu0 0.0
  %337 = vmatpush1.msra.mxu0 0.0
  %338 = vmatprep.subr.mxu0 0.0
  %339 = vmatpush1.msra.mxu0 0.0
  %340 = vmatprep.subr.mxu0 0.0
  %341 = vmatpush1.msra.mxu0 0.0
  %342 = vmatprep.subr.mxu0 0.0
  %343 = vmatpush1.msra.mxu0 0.0
  %344 = vmatprep.subr.mxu0 0.0
  %345 = vmatpush1.msra.mxu0 0.0
  %346 = vmatprep.subr.mxu0 0.0
  %347 = vmatpush1.msra.mxu0 0.0
  %348 = vmatprep.subr.mxu0 0.0
  %349 = vmatpush1.msra.mxu0 0.0
  %350 = vmatprep.mubr.f32.mxu0 0.0
  %351 = vmatmul.mubr.f32.gmra.mrb[0].mxu0 %v284
  %v352 = vpop.f32.mrb[0].mxu0
  %v353 = vadd.f32 %v179, %v352
  %v354 = vpop.f32.mrb[0].mxu0
  %355 = vdwg.mxu0
  %v356 = vadd.f32 %v155, %v353
  %v357 = vxor.u32 %v356, 2147483648
  %v358 = vmul.f32 %v357, 1.442695
  %v359 = vpow.pop %v358
  %v360 = vadd.f32 %v359, 1.0
  %v361 = vrcp.pop %v360
  %v362 = vmul.f32 1.0, %v361
  %364 = vrot.lane.b32.xlu0 %v353, 64
  %v365 = vpop.permute.xlu0 %364
  %v367 = vmul.f32 %v362, %v365
  %369 = vrot.lane.b32.xlu0 %v367, 64
  %v370 = vpop.permute.xlu0 %369
  %v372 = vadd.f32 %v155, %v370
  %v373 = vtanh.pop %v372
  %v374 = vsub.f32 1.0, %v362
  %376 = vrot.lane.b32.xlu0 %v373, 96
  %v377 = vpop.permute.xlu0 %376
  %v379 = vmul.f32 %v374, %v377
  %v380 = vmul.f32 %v362, %v280
  %v381 = vadd.f32 %v379, %v380
  %383 = vrot.lane.b32.xlu0 %v381, 96
  %v384 = vpop.permute.xlu0 %383
  %v385 = vsel %vm181, %v384, 0
  %387 = vmatprep.subr.mxu0 0.0
  %388 = vmatpush1.msra.mxu0 %v170
  %389 = vmatprep.subr.mxu0 0.0
  %390 = vmatpush1.msra.mxu0 %v171
  %391 = vmatprep.subr.mxu0 0.0
  %392 = vmatpush1.msra.mxu0 %v172
  %393 = vmatprep.subr.mxu0 0.0
  %394 = vmatpush1.msra.mxu0 %v173
  %395 = vmatprep.subr.mxu0 0.0
  %396 = vmatpush1.msra.mxu0 0.0
  %397 = vmatprep.subr.mxu0 0.0
  %398 = vmatpush1.msra.mxu0 0.0
  %399 = vmatprep.subr.mxu0 0.0
  %400 = vmatpush1.msra.mxu0 0.0
  %401 = vmatprep.subr.mxu0 0.0
  %402 = vmatpush1.msra.mxu0 0.0
  %403 = vmatprep.subr.mxu0 0.0
  %404 = vmatpush1.msra.mxu0 0.0
  %405 = vmatprep.subr.mxu0 0.0
  %406 = vmatpush1.msra.mxu0 0.0
  %407 = vmatprep.subr.mxu0 0.0
  %408 = vmatpush1.msra.mxu0 0.0
  %409 = vmatprep.subr.mxu0 0.0
  %410 = vmatpush1.msra.mxu0 0.0
  %411 = vmatprep.subr.mxu0 0.0
  %412 = vmatpush1.msra.mxu0 0.0
  %413 = vmatprep.subr.mxu0 0.0
  %414 = vmatpush1.msra.mxu0 0.0
  %415 = vmatprep.subr.mxu0 0.0
  %416 = vmatpush1.msra.mxu0 0.0
  %417 = vmatprep.subr.mxu0 0.0
  %418 = vmatpush1.msra.mxu0 0.0
  %419 = vmatprep.subr.mxu0 0.0
  %420 = vmatpush1.msra.mxu0 0.0
  %421 = vmatprep.subr.mxu0 0.0
  %422 = vmatpush1.msra.mxu0 0.0
  %423 = vmatprep.subr.mxu0 0.0
  %424 = vmatpush1.msra.mxu0 0.0
  %425 = vmatprep.subr.mxu0 0.0
  %426 = vmatpush1.msra.mxu0 0.0
  %427 = vmatprep.subr.mxu0 0.0
  %428 = vmatpush1.msra.mxu0 0.0
  %429 = vmatprep.subr.mxu0 0.0
  %430 = vmatpush1.msra.mxu0 0.0
  %431 = vmatprep.subr.mxu0 0.0
  %432 = vmatpush1.msra.mxu0 0.0
  %433 = vmatprep.subr.mxu0 0.0
  %434 = vmatpush1.msra.mxu0 0.0
  %435 = vmatprep.subr.mxu0 0.0
  %436 = vmatpush1.msra.mxu0 0.0
  %437 = vmatprep.subr.mxu0 0.0
  %438 = vmatpush1.msra.mxu0 0.0
  %439 = vmatprep.subr.mxu0 0.0
  %440 = vmatpush1.msra.mxu0 0.0
  %441 = vmatprep.subr.mxu0 0.0
  %442 = vmatpush1.msra.mxu0 0.0
  %443 = vmatprep.subr.mxu0 0.0
  %444 = vmatpush1.msra.mxu0 0.0
  %445 = vmatprep.subr.mxu0 0.0
  %446 = vmatpush1.msra.mxu0 0.0
  %447 = vmatprep.subr.mxu0 0.0
  %448 = vmatpush1.msra.mxu0 0.0
  %449 = vmatprep.subr.mxu0 0.0
  %450 = vmatpush1.msra.mxu0 0.0
  %451 = vmatprep.mubr.f32.mxu0 0.0
  %452 = vmatmul.mubr.f32.gmra.mrb[0].mxu0 %v385
  %v453 = vpop.f32.mrb[0].mxu0
  %v454 = vadd.f32 %v179, %v453
  %v455 = vpop.f32.mrb[0].mxu0
  %456 = vdwg.mxu0
  %v457 = vadd.f32 %v156, %v454
  %v458 = vxor.u32 %v457, 2147483648
  %v459 = vmul.f32 %v458, 1.442695
  %v460 = vpow.pop %v459
  %v461 = vadd.f32 %v460, 1.0
  %v462 = vrcp.pop %v461
  %v463 = vmul.f32 1.0, %v462
  %465 = vrot.lane.b32.xlu0 %v454, 64
  %v466 = vpop.permute.xlu0 %465
  %v468 = vmul.f32 %v463, %v466
  %470 = vrot.lane.b32.xlu0 %v468, 64
  %v471 = vpop.permute.xlu0 %470
  %v473 = vadd.f32 %v156, %v471
  %v474 = vtanh.pop %v473
  %v475 = vsub.f32 1.0, %v463
  %477 = vrot.lane.b32.xlu0 %v474, 96
  %v478 = vpop.permute.xlu0 %477
  %v480 = vmul.f32 %v475, %v478
  %v481 = vmul.f32 %v463, %v381
  %v482 = vadd.f32 %v480, %v481
  %484 = vrot.lane.b32.xlu0 %v482, 96
  %v485 = vpop.permute.xlu0 %484
  %v486 = vsel %vm181, %v485, 0
  %488 = vmatprep.subr.mxu0 0.0
  %489 = vmatpush1.msra.mxu0 %v170
  %490 = vmatprep.subr.mxu0 0.0
  %491 = vmatpush1.msra.mxu0 %v171
  %492 = vmatprep.subr.mxu0 0.0
  %493 = vmatpush1.msra.mxu0 %v172
  %494 = vmatprep.subr.mxu0 0.0
  %495 = vmatpush1.msra.mxu0 %v173
  %496 = vmatprep.subr.mxu0 0.0
  %497 = vmatpush1.msra.mxu0 0.0
  %498 = vmatprep.subr.mxu0 0.0
  %499 = vmatpush1.msra.mxu0 0.0
  %500 = vmatprep.subr.mxu0 0.0
  %501 = vmatpush1.msra.mxu0 0.0
  %502 = vmatprep.subr.mxu0 0.0
  %503 = vmatpush1.msra.mxu0 0.0
  %504 = vmatprep.subr.mxu0 0.0
  %505 = vmatpush1.msra.mxu0 0.0
  %506 = vmatprep.subr.mxu0 0.0
  %507 = vmatpush1.msra.mxu0 0.0
  %508 = vmatprep.subr.mxu0 0.0
  %509 = vmatpush1.msra.mxu0 0.0
  %510 = vmatprep.subr.mxu0 0.0
  %511 = vmatpush1.msra.mxu0 0.0
  %512 = vmatprep.subr.mxu0 0.0
  %513 = vmatpush1.msra.mxu0 0.0
  %514 = vmatprep.subr.mxu0 0.0
  %515 = vmatpush1.msra.mxu0 0.0
  %516 = vmatprep.subr.mxu0 0.0
  %517 = vmatpush1.msra.mxu0 0.0
  %518 = vmatprep.subr.mxu0 0.0
  %519 = vmatpush1.msra.mxu0 0.0
  %520 = vmatprep.subr.mxu0 0.0
  %521 = vmatpush1.msra.mxu0 0.0
  %522 = vmatprep.subr.mxu0 0.0
  %523 = vmatpush1.msra.mxu0 0.0
  %524 = vmatprep.subr.mxu0 0.0
  %525 = vmatpush1.msra.mxu0 0.0
  %526 = vmatprep.subr.mxu0 0.0
  %527 = vmatpush1.msra.mxu0 0.0
  %528 = vmatprep.subr.mxu0 0.0
  %529 = vmatpush1.msra.mxu0 0.0
  %530 = vmatprep.subr.mxu0 0.0
  %531 = vmatpush1.msra.mxu0 0.0
  %532 = vmatprep.subr.mxu0 0.0
  %533 = vmatpush1.msra.mxu0 0.0
  %534 = vmatprep.subr.mxu0 0.0
  %535 = vmatpush1.msra.mxu0 0.0
  %536 = vmatprep.subr.mxu0 0.0
  %537 = vmatpush1.msra.mxu0 0.0
  %538 = vmatprep.subr.mxu0 0.0
  %539 = vmatpush1.msra.mxu0 0.0
  %540 = vmatprep.subr.mxu0 0.0
  %541 = vmatpush1.msra.mxu0 0.0
  %542 = vmatprep.subr.mxu0 0.0
  %543 = vmatpush1.msra.mxu0 0.0
  %544 = vmatprep.subr.mxu0 0.0
  %545 = vmatpush1.msra.mxu0 0.0
  %546 = vmatprep.subr.mxu0 0.0
  %547 = vmatpush1.msra.mxu0 0.0
  %548 = vmatprep.subr.mxu0 0.0
  %549 = vmatpush1.msra.mxu0 0.0
  %550 = vmatprep.subr.mxu0 0.0
  %551 = vmatpush1.msra.mxu0 0.0
  %552 = vmatprep.mubr.f32.mxu0 0.0
  %553 = vmatmul.mubr.f32.gmra.mrb[0].mxu0 %v486
  %v554 = vpop.f32.mrb[0].mxu0
  %v555 = vadd.f32 %v179, %v554
  %v556 = vpop.f32.mrb[0].mxu0
  %557 = vdwg.mxu0
  %v558 = vadd.f32 %v157, %v555
  %v559 = vxor.u32 %v558, 2147483648
  %v560 = vmul.f32 %v559, 1.442695
  %v561 = vpow.pop %v560
  %v562 = vadd.f32 %v561, 1.0
  %v563 = vrcp.pop %v562
  %v564 = vmul.f32 1.0, %v563
  %566 = vrot.lane.b32.xlu0 %v555, 64
  %v567 = vpop.permute.xlu0 %566
  %v569 = vmul.f32 %v564, %v567
  %571 = vrot.lane.b32.xlu0 %v569, 64
  %v572 = vpop.permute.xlu0 %571
  %v574 = vadd.f32 %v157, %v572
  %v575 = vtanh.pop %v574
  %v576 = vsub.f32 1.0, %v564
  %578 = vrot.lane.b32.xlu0 %v575, 96
  %v579 = vpop.permute.xlu0 %578
  %v581 = vmul.f32 %v576, %v579
  %v582 = vmul.f32 %v564, %v482
  %v583 = vadd.f32 %v581, %v582
  %585 = vrot.lane.b32.xlu0 %v583, 96
  %v586 = vpop.permute.xlu0 %585
  %v587 = vsel %vm181, %v586, 0
  %589 = vmatprep.subr.mxu0 0.0
  %590 = vmatpush1.msra.mxu0 %v170
  %591 = vmatprep.subr.mxu0 0.0
  %592 = vmatpush1.msra.mxu0 %v171
  %593 = vmatprep.subr.mxu0 0.0
  %594 = vmatpush1.msra.mxu0 %v172
  %595 = vmatprep.subr.mxu0 0.0
  %596 = vmatpush1.msra.mxu0 %v173
  %597 = vmatprep.subr.mxu0 0.0
  %598 = vmatpush1.msra.mxu0 0.0
  %599 = vmatprep.subr.mxu0 0.0
  %600 = vmatpush1.msra.mxu0 0.0
  %601 = vmatprep.subr.mxu0 0.0
  %602 = vmatpush1.msra.mxu0 0.0
  %603 = vmatprep.subr.mxu0 0.0
  %604 = vmatpush1.msra.mxu0 0.0
  %605 = vmatprep.subr.mxu0 0.0
  %606 = vmatpush1.msra.mxu0 0.0
  %607 = vmatprep.subr.mxu0 0.0
  %608 = vmatpush1.msra.mxu0 0.0
  %609 = vmatprep.subr.mxu0 0.0
  %610 = vmatpush1.msra.mxu0 0.0
  %611 = vmatprep.subr.mxu0 0.0
  %612 = vmatpush1.msra.mxu0 0.0
  %613 = vmatprep.subr.mxu0 0.0
  %614 = vmatpush1.msra.mxu0 0.0
  %615 = vmatprep.subr.mxu0 0.0
  %616 = vmatpush1.msra.mxu0 0.0
  %617 = vmatprep.subr.mxu0 0.0
  %618 = vmatpush1.msra.mxu0 0.0
  %619 = vmatprep.subr.mxu0 0.0
  %620 = vmatpush1.msra.mxu0 0.0
  %621 = vmatprep.subr.mxu0 0.0
  %622 = vmatpush1.msra.mxu0 0.0
  %623 = vmatprep.subr.mxu0 0.0
  %624 = vmatpush1.msra.mxu0 0.0
  %625 = vmatprep.subr.mxu0 0.0
  %626 = vmatpush1.msra.mxu0 0.0
  %627 = vmatprep.subr.mxu0 0.0
  %628 = vmatpush1.msra.mxu0 0.0
  %629 = vmatprep.subr.mxu0 0.0
  %630 = vmatpush1.msra.mxu0 0.0
  %631 = vmatprep.subr.mxu0 0.0
  %632 = vmatpush1.msra.mxu0 0.0
  %633 = vmatprep.subr.mxu0 0.0
  %634 = vmatpush1.msra.mxu0 0.0
  %635 = vmatprep.subr.mxu0 0.0
  %636 = vmatpush1.msra.mxu0 0.0
  %637 = vmatprep.subr.mxu0 0.0
  %638 = vmatpush1.msra.mxu0 0.0
  %639 = vmatprep.subr.mxu0 0.0
  %640 = vmatpush1.msra.mxu0 0.0
  %641 = vmatprep.subr.mxu0 0.0
  %642 = vmatpush1.msra.mxu0 0.0
  %643 = vmatprep.subr.mxu0 0.0
  %644 = vmatpush1.msra.mxu0 0.0
  %645 = vmatprep.subr.mxu0 0.0
  %646 = vmatpush1.msra.mxu0 0.0
  %647 = vmatprep.subr.mxu0 0.0
  %648 = vmatpush1.msra.mxu0 0.0
  %649 = vmatprep.subr.mxu0 0.0
  %650 = vmatpush1.msra.mxu0 0.0
  %651 = vmatprep.subr.mxu0 0.0
  %652 = vmatpush1.msra.mxu0 0.0
  %653 = vmatprep.mubr.f32.mxu0 0.0
  %654 = vmatmul.mubr.f32.gmra.mrb[0].mxu0 %v587
  %v655 = vpop.f32.mrb[0].mxu0
  %v656 = vadd.f32 %v179, %v655
  %v657 = vpop.f32.mrb[0].mxu0
  %658 = vdwg.mxu0
  %v659 = vadd.f32 %v158, %v656
  %v660 = vxor.u32 %v659, 2147483648
  %v661 = vmul.f32 %v660, 1.442695
  %v662 = vpow.pop %v661
  %v663 = vadd.f32 %v662, 1.0
  %v664 = vrcp.pop %v663
  %v665 = vmul.f32 1.0, %v664
  %667 = vrot.lane.b32.xlu0 %v656, 64
  %v668 = vpop.permute.xlu0 %667
  %v670 = vmul.f32 %v665, %v668
  %672 = vrot.lane.b32.xlu0 %v670, 64
  %v673 = vpop.permute.xlu0 %672
  %v675 = vadd.f32 %v158, %v673
  %v676 = vtanh.pop %v675
  %v677 = vsub.f32 1.0, %v665
  %679 = vrot.lane.b32.xlu0 %v676, 96
  %v680 = vpop.permute.xlu0 %679
  %v682 = vmul.f32 %v677, %v680
  %v683 = vmul.f32 %v665, %v583
  %v684 = vadd.f32 %v682, %v683
  %686 = vrot.lane.b32.xlu0 %v684, 96
  %v687 = vpop.permute.xlu0 %686
  %v688 = vsel %vm181, %v687, 0
  %690 = vmatprep.subr.mxu0 0.0
  %691 = vmatpush1.msra.mxu0 %v170
  %692 = vmatprep.subr.mxu0 0.0
  %693 = vmatpush1.msra.mxu0 %v171
  %694 = vmatprep.subr.mxu0 0.0
  %695 = vmatpush1.msra.mxu0 %v172
  %696 = vmatprep.subr.mxu0 0.0
  %697 = vmatpush1.msra.mxu0 %v173
  %698 = vmatprep.subr.mxu0 0.0
  %699 = vmatpush1.msra.mxu0 0.0
  %700 = vmatprep.subr.mxu0 0.0
  %701 = vmatpush1.msra.mxu0 0.0
  %702 = vmatprep.subr.mxu0 0.0
  %703 = vmatpush1.msra.mxu0 0.0
  %704 = vmatprep.subr.mxu0 0.0
  %705 = vmatpush1.msra.mxu0 0.0
  %706 = vmatprep.subr.mxu0 0.0
  %707 = vmatpush1.msra.mxu0 0.0
  %708 = vmatprep.subr.mxu0 0.0
  %709 = vmatpush1.msra.mxu0 0.0
  %710 = vmatprep.subr.mxu0 0.0
  %711 = vmatpush1.msra.mxu0 0.0
  %712 = vmatprep.subr.mxu0 0.0
  %713 = vmatpush1.msra.mxu0 0.0
  %714 = vmatprep.subr.mxu0 0.0
  %715 = vmatpush1.msra.mxu0 0.0
  %716 = vmatprep.subr.mxu0 0.0
  %717 = vmatpush1.msra.mxu0 0.0
  %718 = vmatprep.subr.mxu0 0.0
  %719 = vmatpush1.msra.mxu0 0.0
  %720 = vmatprep.subr.mxu0 0.0
  %721 = vmatpush1.msra.mxu0 0.0
  %722 = vmatprep.subr.mxu0 0.0
  %723 = vmatpush1.msra.mxu0 0.0
  %724 = vmatprep.subr.mxu0 0.0
  %725 = vmatpush1.msra.mxu0 0.0
  %726 = vmatprep.subr.mxu0 0.0
  %727 = vmatpush1.msra.mxu0 0.0
  %728 = vmatprep.subr.mxu0 0.0
  %729 = vmatpush1.msra.mxu0 0.0
  %730 = vmatprep.subr.mxu0 0.0
  %731 = vmatpush1.msra.mxu0 0.0
  %732 = vmatprep.subr.mxu0 0.0
  %733 = vmatpush1.msra.mxu0 0.0
  %734 = vmatprep.subr.mxu0 0.0
  %735 = vmatpush1.msra.mxu0 0.0
  %736 = vmatprep.subr.mxu0 0.0
  %737 = vmatpush1.msra.mxu0 0.0
  %738 = vmatprep.subr.mxu0 0.0
  %739 = vmatpush1.msra.mxu0 0.0
  %740 = vmatprep.subr.mxu0 0.0
  %741 = vmatpush1.msra.mxu0 0.0
  %742 = vmatprep.subr.mxu0 0.0
  %743 = vmatpush1.msra.mxu0 0.0
  %744 = vmatprep.subr.mxu0 0.0
  %745 = vmatpush1.msra.mxu0 0.0
  %746 = vmatprep.subr.mxu0 0.0
  %747 = vmatpush1.msra.mxu0 0.0
  %748 = vmatprep.subr.mxu0 0.0
  %749 = vmatpush1.msra.mxu0 0.0
  %750 = vmatprep.subr.mxu0 0.0
  %751 = vmatpush1.msra.mxu0 0.0
  %752 = vmatprep.subr.mxu0 0.0
  %753 = vmatpush1.msra.mxu0 0.0
  %754 = vmatprep.mubr.f32.mxu0 0.0
  %755 = vmatmul.mubr.f32.gmra.mrb[0].mxu0 %v688
  %v756 = vpop.f32.mrb[0].mxu0
  %v757 = vadd.f32 %v179, %v756
  %v758 = vpop.f32.mrb[0].mxu0
  %759 = vdwg.mxu0
  %v760 = vadd.f32 %v159, %v757
  %v761 = vxor.u32 %v760, 2147483648
  %v762 = vmul.f32 %v761, 1.442695
  %v763 = vpow.pop %v762
  %v764 = vadd.f32 %v763, 1.0
  %v765 = vrcp.pop %v764
  %v766 = vmul.f32 1.0, %v765
  %768 = vrot.lane.b32.xlu0 %v757, 64
  %v769 = vpop.permute.xlu0 %768
  %v771 = vmul.f32 %v766, %v769
  %773 = vrot.lane.b32.xlu0 %v771, 64
  %v774 = vpop.permute.xlu0 %773
  %v776 = vadd.f32 %v159, %v774
  %v777 = vtanh.pop %v776
  %v778 = vsub.f32 1.0, %v766
  %780 = vrot.lane.b32.xlu0 %v777, 96
  %v781 = vpop.permute.xlu0 %780
  %v783 = vmul.f32 %v778, %v781
  %v784 = vmul.f32 %v766, %v684
  %v785 = vadd.f32 %v783, %v784
  %787 = vrot.lane.b32.xlu0 %v785, 96
  %v788 = vpop.permute.xlu0 %787
  %v789 = vsel %vm181, %v788, 0
  %791 = vmatprep.subr.mxu0 0.0
  %792 = vmatpush1.msra.mxu0 %v170
  %793 = vmatprep.subr.mxu0 0.0
  %794 = vmatpush1.msra.mxu0 %v171
  %795 = vmatprep.subr.mxu0 0.0
  %796 = vmatpush1.msra.mxu0 %v172
  %797 = vmatprep.subr.mxu0 0.0
  %798 = vmatpush1.msra.mxu0 %v173
  %799 = vmatprep.subr.mxu0 0.0
  %800 = vmatpush1.msra.mxu0 0.0
  %801 = vmatprep.subr.mxu0 0.0
  %802 = vmatpush1.msra.mxu0 0.0
  %803 = vmatprep.subr.mxu0 0.0
  %804 = vmatpush1.msra.mxu0 0.0
  %805 = vmatprep.subr.mxu0 0.0
  %806 = vmatpush1.msra.mxu0 0.0
  %807 = vmatprep.subr.mxu0 0.0
  %808 = vmatpush1.msra.mxu0 0.0
  %809 = vmatprep.subr.mxu0 0.0
  %810 = vmatpush1.msra.mxu0 0.0
  %811 = vmatprep.subr.mxu0 0.0
  %812 = vmatpush1.msra.mxu0 0.0
  %813 = vmatprep.subr.mxu0 0.0
  %814 = vmatpush1.msra.mxu0 0.0
  %815 = vmatprep.subr.mxu0 0.0
  %816 = vmatpush1.msra.mxu0 0.0
  %817 = vmatprep.subr.mxu0 0.0
  %818 = vmatpush1.msra.mxu0 0.0
  %819 = vmatprep.subr.mxu0 0.0
  %820 = vmatpush1.msra.mxu0 0.0
  %821 = vmatprep.subr.mxu0 0.0
  %822 = vmatpush1.msra.mxu0 0.0
  %823 = vmatprep.subr.mxu0 0.0
  %824 = vmatpush1.msra.mxu0 0.0
  %825 = vmatprep.subr.mxu0 0.0
  %826 = vmatpush1.msra.mxu0 0.0
  %827 = vmatprep.subr.mxu0 0.0
  %828 = vmatpush1.msra.mxu0 0.0
  %829 = vmatprep.subr.mxu0 0.0
  %830 = vmatpush1.msra.mxu0 0.0
  %831 = vmatprep.subr.mxu0 0.0
  %832 = vmatpush1.msra.mxu0 0.0
  %833 = vmatprep.subr.mxu0 0.0
  %834 = vmatpush1.msra.mxu0 0.0
  %835 = vmatprep.subr.mxu0 0.0
  %836 = vmatpush1.msra.mxu0 0.0
  %837 = vmatprep.subr.mxu0 0.0
  %838 = vmatpush1.msra.mxu0 0.0
  %839 = vmatprep.subr.mxu0 0.0
  %840 = vmatpush1.msra.mxu0 0.0
  %841 = vmatprep.subr.mxu0 0.0
  %842 = vmatpush1.msra.mxu0 0.0
  %843 = vmatprep.subr.mxu0 0.0
  %844 = vmatpush1.msra.mxu0 0.0
  %845 = vmatprep.subr.mxu0 0.0
  %846 = vmatpush1.msra.mxu0 0.0
  %847 = vmatprep.subr.mxu0 0.0
  %848 = vmatpush1.msra.mxu0 0.0
  %849 = vmatprep.subr.mxu0 0.0
  %850 = vmatpush1.msra.mxu0 0.0
  %851 = vmatprep.subr.mxu0 0.0
  %852 = vmatpush1.msra.mxu0 0.0
  %853 = vmatprep.subr.mxu0 0.0
  %854 = vmatpush1.msra.mxu0 0.0
  %855 = vmatprep.mubr.f32.mxu0 0.0
  %856 = vmatmul.mubr.f32.gmra.mrb[0].mxu0 %v789
  %v857 = vpop.f32.mrb[0].mxu0
  %v858 = vadd.f32 %v179, %v857
  %v859 = vpop.f32.mrb[0].mxu0
  %860 = vdwg.mxu0
  %v861 = vadd.f32 %v160, %v858
  %v862 = vxor.u32 %v861, 2147483648
  %v863 = vmul.f32 %v862, 1.442695
  %v864 = vpow.pop %v863
  %v865 = vadd.f32 %v864, 1.0
  %v866 = vrcp.pop %v865
  %v867 = vmul.f32 1.0, %v866
  %869 = vrot.lane.b32.xlu0 %v858, 64
  %v870 = vpop.permute.xlu0 %869
  %v872 = vmul.f32 %v867, %v870
  %874 = vrot.lane.b32.xlu0 %v872, 64
  %v875 = vpop.permute.xlu0 %874
  %v877 = vadd.f32 %v160, %v875
  %v878 = vtanh.pop %v877
  %v879 = vsub.f32 1.0, %v867
  %881 = vrot.lane.b32.xlu0 %v878, 96
  %v882 = vpop.permute.xlu0 %881
  %v884 = vmul.f32 %v879, %v882
  %v885 = vmul.f32 %v867, %v785
  %v886 = vadd.f32 %v884, %v885
  %888 = vrot.lane.b32.xlu0 %v886, 96
  %v889 = vpop.permute.xlu0 %888
  %v890 = vsel %vm181, %v889, 0
  %892 = vmatprep.subr.mxu0 0.0
  %893 = vmatpush1.msra.mxu0 %v170
  %894 = vmatprep.subr.mxu0 0.0
  %895 = vmatpush1.msra.mxu0 %v171
  %896 = vmatprep.subr.mxu0 0.0
  %897 = vmatpush1.msra.mxu0 %v172
  %898 = vmatprep.subr.mxu0 0.0
  %899 = vmatpush1.msra.mxu0 %v173
  %900 = vmatprep.subr.mxu0 0.0
  %901 = vmatpush1.msra.mxu0 0.0
  %902 = vmatprep.subr.mxu0 0.0
  %903 = vmatpush1.msra.mxu0 0.0
  %904 = vmatprep.subr.mxu0 0.0
  %905 = vmatpush1.msra.mxu0 0.0
  %906 = vmatprep.subr.mxu0 0.0
  %907 = vmatpush1.msra.mxu0 0.0
  %908 = vmatprep.subr.mxu0 0.0
  %909 = vmatpush1.msra.mxu0 0.0
  %910 = vmatprep.subr.mxu0 0.0
  %911 = vmatpush1.msra.mxu0 0.0
  %912 = vmatprep.subr.mxu0 0.0
  %913 = vmatpush1.msra.mxu0 0.0
  %914 = vmatprep.subr.mxu0 0.0
  %915 = vmatpush1.msra.mxu0 0.0
  %916 = vmatprep.subr.mxu0 0.0
  %917 = vmatpush1.msra.mxu0 0.0
  %918 = vmatprep.subr.mxu0 0.0
  %919 = vmatpush1.msra.mxu0 0.0
  %920 = vmatprep.subr.mxu0 0.0
  %921 = vmatpush1.msra.mxu0 0.0
  %922 = vmatprep.subr.mxu0 0.0
  %923 = vmatpush1.msra.mxu0 0.0
  %924 = vmatprep.subr.mxu0 0.0
  %925 = vmatpush1.msra.mxu0 0.0
  %926 = vmatprep.subr.mxu0 0.0
  %927 = vmatpush1.msra.mxu0 0.0
  %928 = vmatprep.subr.mxu0 0.0
  %929 = vmatpush1.msra.mxu0 0.0
  %930 = vmatprep.subr.mxu0 0.0
  %931 = vmatpush1.msra.mxu0 0.0
  %932 = vmatprep.subr.mxu0 0.0
  %933 = vmatpush1.msra.mxu0 0.0
  %934 = vmatprep.subr.mxu0 0.0
  %935 = vmatpush1.msra.mxu0 0.0
  %936 = vmatprep.subr.mxu0 0.0
  %937 = vmatpush1.msra.mxu0 0.0
  %938 = vmatprep.subr.mxu0 0.0
  %939 = vmatpush1.msra.mxu0 0.0
  %940 = vmatprep.subr.mxu0 0.0
  %941 = vmatpush1.msra.mxu0 0.0
  %942 = vmatprep.subr.mxu0 0.0
  %943 = vmatpush1.msra.mxu0 0.0
  %944 = vmatprep.subr.mxu0 0.0
  %945 = vmatpush1.msra.mxu0 0.0
  %946 = vmatprep.subr.mxu0 0.0
  %947 = vmatpush1.msra.mxu0 0.0
  %948 = vmatprep.subr.mxu0 0.0
  %949 = vmatpush1.msra.mxu0 0.0
  %950 = vmatprep.subr.mxu0 0.0
  %951 = vmatpush1.msra.mxu0 0.0
  %952 = vmatprep.subr.mxu0 0.0
  %953 = vmatpush1.msra.mxu0 0.0
  %954 = vmatprep.subr.mxu0 0.0
  %955 = vmatpush1.msra.mxu0 0.0
  %956 = vmatprep.mubr.f32.mxu0 0.0
  %957 = vmatmul.mubr.f32.gmra.mrb[0].mxu0 %v890
  %v958 = vpop.f32.mrb[0].mxu0
  %v959 = vadd.f32 %v179, %v958
  %v960 = vpop.f32.mrb[0].mxu0
  %961 = vdwg.mxu0
  %v962 = vadd.f32 %v161, %v959
  %v963 = vxor.u32 %v962, 2147483648
  %v964 = vmul.f32 %v963, 1.442695
  %v965 = vpow.pop %v964
  %v966 = vadd.f32 %v965, 1.0
  %v967 = vrcp.pop %v966
  %v968 = vmul.f32 1.0, %v967
  %970 = vrot.lane.b32.xlu0 %v959, 64
  %v971 = vpop.permute.xlu0 %970
  %v973 = vmul.f32 %v968, %v971
  %975 = vrot.lane.b32.xlu0 %v973, 64
  %v976 = vpop.permute.xlu0 %975
  %v978 = vadd.f32 %v161, %v976
  %v979 = vtanh.pop %v978
  %v980 = vsub.f32 1.0, %v968
  %982 = vrot.lane.b32.xlu0 %v979, 96
  %v983 = vpop.permute.xlu0 %982
  %v985 = vmul.f32 %v980, %v983
  %v986 = vmul.f32 %v968, %v886
  %v987 = vadd.f32 %v985, %v986
  %989 = vrot.lane.b32.xlu0 %v987, 96
  %v990 = vpop.permute.xlu0 %989
  %v991 = vsel %vm181, %v990, 0
  %993 = vmatprep.subr.mxu0 0.0
  %994 = vmatpush1.msra.mxu0 %v170
  %995 = vmatprep.subr.mxu0 0.0
  %996 = vmatpush1.msra.mxu0 %v171
  %997 = vmatprep.subr.mxu0 0.0
  %998 = vmatpush1.msra.mxu0 %v172
  %999 = vmatprep.subr.mxu0 0.0
  %1000 = vmatpush1.msra.mxu0 %v173
  %1001 = vmatprep.subr.mxu0 0.0
  %1002 = vmatpush1.msra.mxu0 0.0
  %1003 = vmatprep.subr.mxu0 0.0
  %1004 = vmatpush1.msra.mxu0 0.0
  %1005 = vmatprep.subr.mxu0 0.0
  %1006 = vmatpush1.msra.mxu0 0.0
  %1007 = vmatprep.subr.mxu0 0.0
  %1008 = vmatpush1.msra.mxu0 0.0
  %1009 = vmatprep.subr.mxu0 0.0
  %1010 = vmatpush1.msra.mxu0 0.0
  %1011 = vmatprep.subr.mxu0 0.0
  %1012 = vmatpush1.msra.mxu0 0.0
  %1013 = vmatprep.subr.mxu0 0.0
  %1014 = vmatpush1.msra.mxu0 0.0
  %1015 = vmatprep.subr.mxu0 0.0
  %1016 = vmatpush1.msra.mxu0 0.0
  %1017 = vmatprep.subr.mxu0 0.0
  %1018 = vmatpush1.msra.mxu0 0.0
  %1019 = vmatprep.subr.mxu0 0.0
  %1020 = vmatpush1.msra.mxu0 0.0
  %1021 = vmatprep.subr.mxu0 0.0
  %1022 = vmatpush1.msra.mxu0 0.0
  %1023 = vmatprep.subr.mxu0 0.0
  %1024 = vmatpush1.msra.mxu0 0.0
  %1025 = vmatprep.subr.mxu0 0.0
  %1026 = vmatpush1.msra.mxu0 0.0
  %1027 = vmatprep.subr.mxu0 0.0
  %1028 = vmatpush1.msra.mxu0 0.0
  %1029 = vmatprep.subr.mxu0 0.0
  %1030 = vmatpush1.msra.mxu0 0.0
  %1031 = vmatprep.subr.mxu0 0.0
  %1032 = vmatpush1.msra.mxu0 0.0
  %1033 = vmatprep.subr.mxu0 0.0
  %1034 = vmatpush1.msra.mxu0 0.0
  %1035 = vmatprep.subr.mxu0 0.0
  %1036 = vmatpush1.msra.mxu0 0.0
  %1037 = vmatprep.subr.mxu0 0.0
  %1038 = vmatpush1.msra.mxu0 0.0
  %1039 = vmatprep.subr.mxu0 0.0
  %1040 = vmatpush1.msra.mxu0 0.0
  %1041 = vmatprep.subr.mxu0 0.0
  %1042 = vmatpush1.msra.mxu0 0.0
  %1043 = vmatprep.subr.mxu0 0.0
  %1044 = vmatpush1.msra.mxu0 0.0
  %1045 = vmatprep.subr.mxu0 0.0
  %1046 = vmatpush1.msra.mxu0 0.0
  %1047 = vmatprep.subr.mxu0 0.0
  %1048 = vmatpush1.msra.mxu0 0.0
  %1049 = vmatprep.subr.mxu0 0.0
  %1050 = vmatpush1.msra.mxu0 0.0
  %1051 = vmatprep.subr.mxu0 0.0
  %1052 = vmatpush1.msra.mxu0 0.0
  %1053 = vmatprep.subr.mxu0 0.0
  %1054 = vmatpush1.msra.mxu0 0.0
  %1055 = vmatprep.subr.mxu0 0.0
  %1056 = vmatpush1.msra.mxu0 0.0
  %1057 = vmatprep.mubr.f32.mxu0 0.0
  %1058 = vmatmul.mubr.f32.gmra.mrb[0].mxu0 %v991
  %v1059 = vpop.f32.mrb[0].mxu0
  %v1060 = vadd.f32 %v179, %v1059
  %v1061 = vpop.f32.mrb[0].mxu0
  %1062 = vdwg.mxu0
  %v1063 = vadd.f32 %v162, %v1060
  %v1064 = vxor.u32 %v1063, 2147483648
  %v1065 = vmul.f32 %v1064, 1.442695
  %v1066 = vpow.pop %v1065
  %v1067 = vadd.f32 %v1066, 1.0
  %v1068 = vrcp.pop %v1067
  %v1069 = vmul.f32 1.0, %v1068
  %1071 = vrot.lane.b32.xlu0 %v1060, 64
  %v1072 = vpop.permute.xlu0 %1071
  %v1074 = vmul.f32 %v1069, %v1072
  %1076 = vrot.lane.b32.xlu0 %v1074, 64
  %v1077 = vpop.permute.xlu0 %1076
  %v1079 = vadd.f32 %v162, %v1077
  %v1080 = vtanh.pop %v1079
  %v1081 = vsub.f32 1.0, %v1069
  %1083 = vrot.lane.b32.xlu0 %v1080, 96
  %v1084 = vpop.permute.xlu0 %1083
  %v1086 = vmul.f32 %v1081, %v1084
  %v1087 = vmul.f32 %v1069, %v987
  %v1088 = vadd.f32 %v1086, %v1087
  %1090 = vrot.lane.b32.xlu0 %v1088, 96
  %v1091 = vpop.permute.xlu0 %1090
  %v1092 = vsel %vm181, %v1091, 0
  %1094 = vmatprep.subr.mxu0 0.0
  %1095 = vmatpush1.msra.mxu0 %v170
  %1096 = vmatprep.subr.mxu0 0.0
  %1097 = vmatpush1.msra.mxu0 %v171
  %1098 = vmatprep.subr.mxu0 0.0
  %1099 = vmatpush1.msra.mxu0 %v172
  %1100 = vmatprep.subr.mxu0 0.0
  %1101 = vmatpush1.msra.mxu0 %v173
  %1102 = vmatprep.subr.mxu0 0.0
  %1103 = vmatpush1.msra.mxu0 0.0
  %1104 = vmatprep.subr.mxu0 0.0
  %1105 = vmatpush1.msra.mxu0 0.0
  %1106 = vmatprep.subr.mxu0 0.0
  %1107 = vmatpush1.msra.mxu0 0.0
  %1108 = vmatprep.subr.mxu0 0.0
  %1109 = vmatpush1.msra.mxu0 0.0
  %1110 = vmatprep.subr.mxu0 0.0
  %1111 = vmatpush1.msra.mxu0 0.0
  %1112 = vmatprep.subr.mxu0 0.0
  %1113 = vmatpush1.msra.mxu0 0.0
  %1114 = vmatprep.subr.mxu0 0.0
  %1115 = vmatpush1.msra.mxu0 0.0
  %1116 = vmatprep.subr.mxu0 0.0
  %1117 = vmatpush1.msra.mxu0 0.0
  %1118 = vmatprep.subr.mxu0 0.0
  %1119 = vmatpush1.msra.mxu0 0.0
  %1120 = vmatprep.subr.mxu0 0.0
  %1121 = vmatpush1.msra.mxu0 0.0
  %1122 = vmatprep.subr.mxu0 0.0
  %1123 = vmatpush1.msra.mxu0 0.0
  %1124 = vmatprep.subr.mxu0 0.0
  %1125 = vmatpush1.msra.mxu0 0.0
  %1126 = vmatprep.subr.mxu0 0.0
  %1127 = vmatpush1.msra.mxu0 0.0
  %1128 = vmatprep.subr.mxu0 0.0
  %1129 = vmatpush1.msra.mxu0 0.0
  %1130 = vmatprep.subr.mxu0 0.0
  %1131 = vmatpush1.msra.mxu0 0.0
  %1132 = vmatprep.subr.mxu0 0.0
  %1133 = vmatpush1.msra.mxu0 0.0
  %1134 = vmatprep.subr.mxu0 0.0
  %1135 = vmatpush1.msra.mxu0 0.0
  %1136 = vmatprep.subr.mxu0 0.0
  %1137 = vmatpush1.msra.mxu0 0.0
  %1138 = vmatprep.subr.mxu0 0.0
  %1139 = vmatpush1.msra.mxu0 0.0
  %1140 = vmatprep.subr.mxu0 0.0
  %1141 = vmatpush1.msra.mxu0 0.0
  %1142 = vmatprep.subr.mxu0 0.0
  %1143 = vmatpush1.msra.mxu0 0.0
  %1144 = vmatprep.subr.mxu0 0.0
  %1145 = vmatpush1.msra.mxu0 0.0
  %1146 = vmatprep.subr.mxu0 0.0
  %1147 = vmatpush1.msra.mxu0 0.0
  %1148 = vmatprep.subr.mxu0 0.0
  %1149 = vmatpush1.msra.mxu0 0.0
  %1150 = vmatprep.subr.mxu0 0.0
  %1151 = vmatpush1.msra.mxu0 0.0
  %1152 = vmatprep.subr.mxu0 0.0
  %1153 = vmatpush1.msra.mxu0 0.0
  %1154 = vmatprep.subr.mxu0 0.0
  %1155 = vmatpush1.msra.mxu0 0.0
  %1156 = vmatprep.subr.mxu0 0.0
  %1157 = vmatpush1.msra.mxu0 0.0
  %1158 = vmatprep.mubr.f32.mxu0 0.0
  %1159 = vmatmul.mubr.f32.gmra.mrb[0].mxu0 %v1092
  %v1160 = vpop.f32.mrb[0].mxu0
  %v1161 = vadd.f32 %v179, %v1160
  %v1162 = vpop.f32.mrb[0].mxu0
  %1163 = vdwg.mxu0
  %v1164 = vadd.f32 %v163, %v1161
  %v1165 = vxor.u32 %v1164, 2147483648
  %v1166 = vmul.f32 %v1165, 1.442695
  %v1167 = vpow.pop %v1166
  %v1168 = vadd.f32 %v1167, 1.0
  %v1169 = vrcp.pop %v1168
  %v1170 = vmul.f32 1.0, %v1169
  %1172 = vrot.lane.b32.xlu0 %v1161, 64
  %v1173 = vpop.permute.xlu0 %1172
  %v1175 = vmul.f32 %v1170, %v1173
  %1177 = vrot.lane.b32.xlu0 %v1175, 64
  %v1178 = vpop.permute.xlu0 %1177
  %v1180 = vadd.f32 %v163, %v1178
  %v1181 = vtanh.pop %v1180
  %v1182 = vsub.f32 1.0, %v1170
  %1184 = vrot.lane.b32.xlu0 %v1181, 96
  %v1185 = vpop.permute.xlu0 %1184
  %v1187 = vmul.f32 %v1182, %v1185
  %v1188 = vmul.f32 %v1170, %v1088
  %v1189 = vadd.f32 %v1187, %v1188
  %1191 = vrot.lane.b32.xlu0 %v1189, 96
  %v1192 = vpop.permute.xlu0 %1191
  %v1193 = vsel %vm181, %v1192, 0
  %1195 = vmatprep.subr.mxu0 0.0
  %1196 = vmatpush1.msra.mxu0 %v170
  %1197 = vmatprep.subr.mxu0 0.0
  %1198 = vmatpush1.msra.mxu0 %v171
  %1199 = vmatprep.subr.mxu0 0.0
  %1200 = vmatpush1.msra.mxu0 %v172
  %1201 = vmatprep.subr.mxu0 0.0
  %1202 = vmatpush1.msra.mxu0 %v173
  %1203 = vmatprep.subr.mxu0 0.0
  %1204 = vmatpush1.msra.mxu0 0.0
  %1205 = vmatprep.subr.mxu0 0.0
  %1206 = vmatpush1.msra.mxu0 0.0
  %1207 = vmatprep.subr.mxu0 0.0
  %1208 = vmatpush1.msra.mxu0 0.0
  %1209 = vmatprep.subr.mxu0 0.0
  %1210 = vmatpush1.msra.mxu0 0.0
  %1211 = vmatprep.subr.mxu0 0.0
  %1212 = vmatpush1.msra.mxu0 0.0
  %1213 = vmatprep.subr.mxu0 0.0
  %1214 = vmatpush1.msra.mxu0 0.0
  %1215 = vmatprep.subr.mxu0 0.0
  %1216 = vmatpush1.msra.mxu0 0.0
  %1217 = vmatprep.subr.mxu0 0.0
  %1218 = vmatpush1.msra.mxu0 0.0
  %1219 = vmatprep.subr.mxu0 0.0
  %1220 = vmatpush1.msra.mxu0 0.0
  %1221 = vmatprep.subr.mxu0 0.0
  %1222 = vmatpush1.msra.mxu0 0.0
  %1223 = vmatprep.subr.mxu0 0.0
  %1224 = vmatpush1.msra.mxu0 0.0
  %1225 = vmatprep.subr.mxu0 0.0
  %1226 = vmatpush1.msra.mxu0 0.0
  %1227 = vmatprep.subr.mxu0 0.0
  %1228 = vmatpush1.msra.mxu0 0.0
  %1229 = vmatprep.subr.mxu0 0.0
  %1230 = vmatpush1.msra.mxu0 0.0
  %1231 = vmatprep.subr.mxu0 0.0
  %1232 = vmatpush1.msra.mxu0 0.0
  %1233 = vmatprep.subr.mxu0 0.0
  %1234 = vmatpush1.msra.mxu0 0.0
  %1235 = vmatprep.subr.mxu0 0.0
  %1236 = vmatpush1.msra.mxu0 0.0
  %1237 = vmatprep.subr.mxu0 0.0
  %1238 = vmatpush1.msra.mxu0 0.0
  %1239 = vmatprep.subr.mxu0 0.0
  %1240 = vmatpush1.msra.mxu0 0.0
  %1241 = vmatprep.subr.mxu0 0.0
  %1242 = vmatpush1.msra.mxu0 0.0
  %1243 = vmatprep.subr.mxu0 0.0
  %1244 = vmatpush1.msra.mxu0 0.0
  %1245 = vmatprep.subr.mxu0 0.0
  %1246 = vmatpush1.msra.mxu0 0.0
  %1247 = vmatprep.subr.mxu0 0.0
  %1248 = vmatpush1.msra.mxu0 0.0
  %1249 = vmatprep.subr.mxu0 0.0
  %1250 = vmatpush1.msra.mxu0 0.0
  %1251 = vmatprep.subr.mxu0 0.0
  %1252 = vmatpush1.msra.mxu0 0.0
  %1253 = vmatprep.subr.mxu0 0.0
  %1254 = vmatpush1.msra.mxu0 0.0
  %1255 = vmatprep.subr.mxu0 0.0
  %1256 = vmatpush1.msra.mxu0 0.0
  %1257 = vmatprep.subr.mxu0 0.0
  %1258 = vmatpush1.msra.mxu0 0.0
  %1259 = vmatprep.mubr.f32.mxu0 0.0
  %1260 = vmatmul.mubr.f32.gmra.mrb[0].mxu0 %v1193
  %v1261 = vpop.f32.mrb[0].mxu0
  %v1262 = vadd.f32 %v179, %v1261
  %v1263 = vpop.f32.mrb[0].mxu0
  %1264 = vdwg.mxu0
  %v1265 = vadd.f32 %v164, %v1262
  %v1266 = vxor.u32 %v1265, 2147483648
  %v1267 = vmul.f32 %v1266, 1.442695
  %v1268 = vpow.pop %v1267
  %v1269 = vadd.f32 %v1268, 1.0
  %v1270 = vrcp.pop %v1269
  %v1271 = vmul.f32 1.0, %v1270
  %1273 = vrot.lane.b32.xlu0 %v1262, 64
  %v1274 = vpop.permute.xlu0 %1273
  %v1276 = vmul.f32 %v1271, %v1274
  %1278 = vrot.lane.b32.xlu0 %v1276, 64
  %v1279 = vpop.permute.xlu0 %1278
  %v1281 = vadd.f32 %v164, %v1279
  %v1282 = vtanh.pop %v1281
  %v1283 = vsub.f32 1.0, %v1271
  %1285 = vrot.lane.b32.xlu0 %v1282, 96
  %v1286 = vpop.permute.xlu0 %1285
  %v1288 = vmul.f32 %v1283, %v1286
  %v1289 = vmul.f32 %v1271, %v1189
  %v1290 = vadd.f32 %v1288, %v1289
  %1292 = vrot.lane.b32.xlu0 %v1290, 96
  %v1293 = vpop.permute.xlu0 %1292
  %v1294 = vsel %vm181, %v1293, 0
  %1296 = vmatprep.subr.mxu0 0.0
  %1297 = vmatpush1.msra.mxu0 %v170
  %1298 = vmatprep.subr.mxu0 0.0
  %1299 = vmatpush1.msra.mxu0 %v171
  %1300 = vmatprep.subr.mxu0 0.0
  %1301 = vmatpush1.msra.mxu0 %v172
  %1302 = vmatprep.subr.mxu0 0.0
  %1303 = vmatpush1.msra.mxu0 %v173
  %1304 = vmatprep.subr.mxu0 0.0
  %1305 = vmatpush1.msra.mxu0 0.0
  %1306 = vmatprep.subr.mxu0 0.0
  %1307 = vmatpush1.msra.mxu0 0.0
  %1308 = vmatprep.subr.mxu0 0.0
  %1309 = vmatpush1.msra.mxu0 0.0
  %1310 = vmatprep.subr.mxu0 0.0
  %1311 = vmatpush1.msra.mxu0 0.0
  %1312 = vmatprep.subr.mxu0 0.0
  %1313 = vmatpush1.msra.mxu0 0.0
  %1314 = vmatprep.subr.mxu0 0.0
  %1315 = vmatpush1.msra.mxu0 0.0
  %1316 = vmatprep.subr.mxu0 0.0
  %1317 = vmatpush1.msra.mxu0 0.0
  %1318 = vmatprep.subr.mxu0 0.0
  %1319 = vmatpush1.msra.mxu0 0.0
  %1320 = vmatprep.subr.mxu0 0.0
  %1321 = vmatpush1.msra.mxu0 0.0
  %1322 = vmatprep.subr.mxu0 0.0
  %1323 = vmatpush1.msra.mxu0 0.0
  %1324 = vmatprep.subr.mxu0 0.0
  %1325 = vmatpush1.msra.mxu0 0.0
  %1326 = vmatprep.subr.mxu0 0.0
  %1327 = vmatpush1.msra.mxu0 0.0
  %1328 = vmatprep.subr.mxu0 0.0
  %1329 = vmatpush1.msra.mxu0 0.0
  %1330 = vmatprep.subr.mxu0 0.0
  %1331 = vmatpush1.msra.mxu0 0.0
  %1332 = vmatprep.subr.mxu0 0.0
  %1333 = vmatpush1.msra.mxu0 0.0
  %1334 = vmatprep.subr.mxu0 0.0
  %1335 = vmatpush1.msra.mxu0 0.0
  %1336 = vmatprep.subr.mxu0 0.0
  %1337 = vmatpush1.msra.mxu0 0.0
  %1338 = vmatprep.subr.mxu0 0.0
  %1339 = vmatpush1.msra.mxu0 0.0
  %1340 = vmatprep.subr.mxu0 0.0
  %1341 = vmatpush1.msra.mxu0 0.0
  %1342 = vmatprep.subr.mxu0 0.0
  %1343 = vmatpush1.msra.mxu0 0.0
  %1344 = vmatprep.subr.mxu0 0.0
  %1345 = vmatpush1.msra.mxu0 0.0
  %1346 = vmatprep.subr.mxu0 0.0
  %1347 = vmatpush1.msra.mxu0 0.0
  %1348 = vmatprep.subr.mxu0 0.0
  %1349 = vmatpush1.msra.mxu0 0.0
  %1350 = vmatprep.subr.mxu0 0.0
  %1351 = vmatpush1.msra.mxu0 0.0
  %1352 = vmatprep.subr.mxu0 0.0
  %1353 = vmatpush1.msra.mxu0 0.0
  %1354 = vmatprep.subr.mxu0 0.0
  %1355 = vmatpush1.msra.mxu0 0.0
  %1356 = vmatprep.subr.mxu0 0.0
  %1357 = vmatpush1.msra.mxu0 0.0
  %1358 = vmatprep.subr.mxu0 0.0
  %1359 = vmatpush1.msra.mxu0 0.0
  %1360 = vmatprep.mubr.f32.mxu0 0.0
  %1361 = vmatmul.mubr.f32.gmra.mrb[0].mxu0 %v1294
  %v1362 = vpop.f32.mrb[0].mxu0
  %v1363 = vadd.f32 %v179, %v1362
  %v1364 = vpop.f32.mrb[0].mxu0
  %1365 = vdwg.mxu0
  %v1366 = vadd.f32 %v165, %v1363
  %v1367 = vxor.u32 %v1366, 2147483648
  %v1368 = vmul.f32 %v1367, 1.442695
  %v1369 = vpow.pop %v1368
  %v1370 = vadd.f32 %v1369, 1.0
  %v1371 = vrcp.pop %v1370
  %v1372 = vmul.f32 1.0, %v1371
  %1374 = vrot.lane.b32.xlu0 %v1363, 64
  %v1375 = vpop.permute.xlu0 %1374
  %v1377 = vmul.f32 %v1372, %v1375
  %1379 = vrot.lane.b32.xlu0 %v1377, 64
  %v1380 = vpop.permute.xlu0 %1379
  %v1382 = vadd.f32 %v165, %v1380
  %v1383 = vtanh.pop %v1382
  %v1384 = vsub.f32 1.0, %v1372
  %1386 = vrot.lane.b32.xlu0 %v1383, 96
  %v1387 = vpop.permute.xlu0 %1386
  %v1389 = vmul.f32 %v1384, %v1387
  %v1390 = vmul.f32 %v1372, %v1290
  %v1391 = vadd.f32 %v1389, %v1390
  %1393 = vrot.lane.b32.xlu0 %v1391, 96
  %v1394 = vpop.permute.xlu0 %1393
  %v1395 = vsel %vm181, %v1394, 0
  %1397 = vmatprep.subr.mxu0 0.0
  %1398 = vmatpush1.msra.mxu0 %v170
  %1399 = vmatprep.subr.mxu0 0.0
  %1400 = vmatpush1.msra.mxu0 %v171
  %1401 = vmatprep.subr.mxu0 0.0
  %1402 = vmatpush1.msra.mxu0 %v172
  %1403 = vmatprep.subr.mxu0 0.0
  %1404 = vmatpush1.msra.mxu0 %v173
  %1405 = vmatprep.subr.mxu0 0.0
  %1406 = vmatpush1.msra.mxu0 0.0
  %1407 = vmatprep.subr.mxu0 0.0
  %1408 = vmatpush1.msra.mxu0 0.0
  %1409 = vmatprep.subr.mxu0 0.0
  %1410 = vmatpush1.msra.mxu0 0.0
  %1411 = vmatprep.subr.mxu0 0.0
  %1412 = vmatpush1.msra.mxu0 0.0
  %1413 = vmatprep.subr.mxu0 0.0
  %1414 = vmatpush1.msra.mxu0 0.0
  %1415 = vmatprep.subr.mxu0 0.0
  %1416 = vmatpush1.msra.mxu0 0.0
  %1417 = vmatprep.subr.mxu0 0.0
  %1418 = vmatpush1.msra.mxu0 0.0
  %1419 = vmatprep.subr.mxu0 0.0
  %1420 = vmatpush1.msra.mxu0 0.0
  %1421 = vmatprep.subr.mxu0 0.0
  %1422 = vmatpush1.msra.mxu0 0.0
  %1423 = vmatprep.subr.mxu0 0.0
  %1424 = vmatpush1.msra.mxu0 0.0
  %1425 = vmatprep.subr.mxu0 0.0
  %1426 = vmatpush1.msra.mxu0 0.0
  %1427 = vmatprep.subr.mxu0 0.0
  %1428 = vmatpush1.msra.mxu0 0.0
  %1429 = vmatprep.subr.mxu0 0.0
  %1430 = vmatpush1.msra.mxu0 0.0
  %1431 = vmatprep.subr.mxu0 0.0
  %1432 = vmatpush1.msra.mxu0 0.0
  %1433 = vmatprep.subr.mxu0 0.0
  %1434 = vmatpush1.msra.mxu0 0.0
  %1435 = vmatprep.subr.mxu0 0.0
  %1436 = vmatpush1.msra.mxu0 0.0
  %1437 = vmatprep.subr.mxu0 0.0
  %1438 = vmatpush1.msra.mxu0 0.0
  %1439 = vmatprep.subr.mxu0 0.0
  %1440 = vmatpush1.msra.mxu0 0.0
  %1441 = vmatprep.subr.mxu0 0.0
  %1442 = vmatpush1.msra.mxu0 0.0
  %1443 = vmatprep.subr.mxu0 0.0
  %1444 = vmatpush1.msra.mxu0 0.0
  %1445 = vmatprep.subr.mxu0 0.0
  %1446 = vmatpush1.msra.mxu0 0.0
  %1447 = vmatprep.subr.mxu0 0.0
  %1448 = vmatpush1.msra.mxu0 0.0
  %1449 = vmatprep.subr.mxu0 0.0
  %1450 = vmatpush1.msra.mxu0 0.0
  %1451 = vmatprep.subr.mxu0 0.0
  %1452 = vmatpush1.msra.mxu0 0.0
  %1453 = vmatprep.subr.mxu0 0.0
  %1454 = vmatpush1.msra.mxu0 0.0
  %1455 = vmatprep.subr.mxu0 0.0
  %1456 = vmatpush1.msra.mxu0 0.0
  %1457 = vmatprep.subr.mxu0 0.0
  %1458 = vmatpush1.msra.mxu0 0.0
  %1459 = vmatprep.subr.mxu0 0.0
  %1460 = vmatpush1.msra.mxu0 0.0
  %1461 = vmatprep.mubr.f32.mxu0 0.0
  %1462 = vmatmul.mubr.f32.gmra.mrb[0].mxu0 %v1395
  %v1463 = vpop.f32.mrb[0].mxu0
  %v1464 = vadd.f32 %v179, %v1463
  %v1465 = vpop.f32.mrb[0].mxu0
  %1466 = vdwg.mxu0
  %v1467 = vadd.f32 %v166, %v1464
  %v1468 = vxor.u32 %v1467, 2147483648
  %v1469 = vmul.f32 %v1468, 1.442695
  %v1470 = vpow.pop %v1469
  %v1471 = vadd.f32 %v1470, 1.0
  %v1472 = vrcp.pop %v1471
  %v1473 = vmul.f32 1.0, %v1472
  %1475 = vrot.lane.b32.xlu0 %v1464, 64
  %v1476 = vpop.permute.xlu0 %1475
  %v1478 = vmul.f32 %v1473, %v1476
  %1480 = vrot.lane.b32.xlu0 %v1478, 64
  %v1481 = vpop.permute.xlu0 %1480
  %v1483 = vadd.f32 %v166, %v1481
  %v1484 = vtanh.pop %v1483
  %v1485 = vsub.f32 1.0, %v1473
  %1487 = vrot.lane.b32.xlu0 %v1484, 96
  %v1488 = vpop.permute.xlu0 %1487
  %v1490 = vmul.f32 %v1485, %v1488
  %v1491 = vmul.f32 %v1473, %v1391
  %v1492 = vadd.f32 %v1490, %v1491
  %1494 = vrot.lane.b32.xlu0 %v1492, 96
  %v1495 = vpop.permute.xlu0 %1494
  %v1496 = vsel %vm181, %v1495, 0
  %1498 = vmatprep.subr.mxu0 0.0
  %1499 = vmatpush1.msra.mxu0 %v170
  %1500 = vmatprep.subr.mxu0 0.0
  %1501 = vmatpush1.msra.mxu0 %v171
  %1502 = vmatprep.subr.mxu0 0.0
  %1503 = vmatpush1.msra.mxu0 %v172
  %1504 = vmatprep.subr.mxu0 0.0
  %1505 = vmatpush1.msra.mxu0 %v173
  %1506 = vmatprep.subr.mxu0 0.0
  %1507 = vmatpush1.msra.mxu0 0.0
  %1508 = vmatprep.subr.mxu0 0.0
  %1509 = vmatpush1.msra.mxu0 0.0
  %1510 = vmatprep.subr.mxu0 0.0
  %1511 = vmatpush1.msra.mxu0 0.0
  %1512 = vmatprep.subr.mxu0 0.0
  %1513 = vmatpush1.msra.mxu0 0.0
  %1514 = vmatprep.subr.mxu0 0.0
  %1515 = vmatpush1.msra.mxu0 0.0
  %1516 = vmatprep.subr.mxu0 0.0
  %1517 = vmatpush1.msra.mxu0 0.0
  %1518 = vmatprep.subr.mxu0 0.0
  %1519 = vmatpush1.msra.mxu0 0.0
  %1520 = vmatprep.subr.mxu0 0.0
  %1521 = vmatpush1.msra.mxu0 0.0
  %1522 = vmatprep.subr.mxu0 0.0
  %1523 = vmatpush1.msra.mxu0 0.0
  %1524 = vmatprep.subr.mxu0 0.0
  %1525 = vmatpush1.msra.mxu0 0.0
  %1526 = vmatprep.subr.mxu0 0.0
  %1527 = vmatpush1.msra.mxu0 0.0
  %1528 = vmatprep.subr.mxu0 0.0
  %1529 = vmatpush1.msra.mxu0 0.0
  %1530 = vmatprep.subr.mxu0 0.0
  %1531 = vmatpush1.msra.mxu0 0.0
  %1532 = vmatprep.subr.mxu0 0.0
  %1533 = vmatpush1.msra.mxu0 0.0
  %1534 = vmatprep.subr.mxu0 0.0
  %1535 = vmatpush1.msra.mxu0 0.0
  %1536 = vmatprep.subr.mxu0 0.0
  %1537 = vmatpush1.msra.mxu0 0.0
  %1538 = vmatprep.subr.mxu0 0.0
  %1539 = vmatpush1.msra.mxu0 0.0
  %1540 = vmatprep.subr.mxu0 0.0
  %1541 = vmatpush1.msra.mxu0 0.0
  %1542 = vmatprep.subr.mxu0 0.0
  %1543 = vmatpush1.msra.mxu0 0.0
  %1544 = vmatprep.subr.mxu0 0.0
  %1545 = vmatpush1.msra.mxu0 0.0
  %1546 = vmatprep.subr.mxu0 0.0
  %1547 = vmatpush1.msra.mxu0 0.0
  %1548 = vmatprep.subr.mxu0 0.0
  %1549 = vmatpush1.msra.mxu0 0.0
  %1550 = vmatprep.subr.mxu0 0.0
  %1551 = vmatpush1.msra.mxu0 0.0
  %1552 = vmatprep.subr.mxu0 0.0
  %1553 = vmatpush1.msra.mxu0 0.0
  %1554 = vmatprep.subr.mxu0 0.0
  %1555 = vmatpush1.msra.mxu0 0.0
  %1556 = vmatprep.subr.mxu0 0.0
  %1557 = vmatpush1.msra.mxu0 0.0
  %1558 = vmatprep.subr.mxu0 0.0
  %1559 = vmatpush1.msra.mxu0 0.0
  %1560 = vmatprep.subr.mxu0 0.0
  %1561 = vmatpush1.msra.mxu0 0.0
  %1562 = vmatprep.mubr.f32.mxu0 0.0
  %1563 = vmatmul.mubr.f32.gmra.mrb[0].mxu0 %v1496
  %v1564 = vpop.f32.mrb[0].mxu0
  %v1565 = vadd.f32 %v179, %v1564
  %v1566 = vpop.f32.mrb[0].mxu0
  %1567 = vdwg.mxu0
  %v1568 = vadd.f32 %v167, %v1565
  %v1569 = vxor.u32 %v1568, 2147483648
  %v1570 = vmul.f32 %v1569, 1.442695
  %v1571 = vpow.pop %v1570
  %v1572 = vadd.f32 %v1571, 1.0
  %v1573 = vrcp.pop %v1572
  %v1574 = vmul.f32 1.0, %v1573
  %1576 = vrot.lane.b32.xlu0 %v1565, 64
  %v1577 = vpop.permute.xlu0 %1576
  %v1579 = vmul.f32 %v1574, %v1577
  %1581 = vrot.lane.b32.xlu0 %v1579, 64
  %v1582 = vpop.permute.xlu0 %1581
  %v1584 = vadd.f32 %v167, %v1582
  %v1585 = vtanh.pop %v1584
  %v1586 = vsub.f32 1.0, %v1574
  %1588 = vrot.lane.b32.xlu0 %v1585, 96
  %v1589 = vpop.permute.xlu0 %1588
  %v1591 = vmul.f32 %v1586, %v1589
  %v1592 = vmul.f32 %v1574, %v1492
  %v1593 = vadd.f32 %v1591, %v1592
  %1595 = vrot.lane.b32.xlu0 %v1593, 96
  %v1596 = vpop.permute.xlu0 %1595
  %v1597 = vsel %vm181, %v1596, 0
  %1599 = vmatprep.subr.mxu0 0.0
  %1600 = vmatpush1.msra.mxu0 %v170
  %1601 = vmatprep.subr.mxu0 0.0
  %1602 = vmatpush1.msra.mxu0 %v171
  %1603 = vmatprep.subr.mxu0 0.0
  %1604 = vmatpush1.msra.mxu0 %v172
  %1605 = vmatprep.subr.mxu0 0.0
  %1606 = vmatpush1.msra.mxu0 %v173
  %1607 = vmatprep.subr.mxu0 0.0
  %1608 = vmatpush1.msra.mxu0 0.0
  %1609 = vmatprep.subr.mxu0 0.0
  %1610 = vmatpush1.msra.mxu0 0.0
  %1611 = vmatprep.subr.mxu0 0.0
  %1612 = vmatpush1.msra.mxu0 0.0
  %1613 = vmatprep.subr.mxu0 0.0
  %1614 = vmatpush1.msra.mxu0 0.0
  %1615 = vmatprep.subr.mxu0 0.0
  %1616 = vmatpush1.msra.mxu0 0.0
  %1617 = vmatprep.subr.mxu0 0.0
  %1618 = vmatpush1.msra.mxu0 0.0
  %1619 = vmatprep.subr.mxu0 0.0
  %1620 = vmatpush1.msra.mxu0 0.0
  %1621 = vmatprep.subr.mxu0 0.0
  %1622 = vmatpush1.msra.mxu0 0.0
  %1623 = vmatprep.subr.mxu0 0.0
  %1624 = vmatpush1.msra.mxu0 0.0
  %1625 = vmatprep.subr.mxu0 0.0
  %1626 = vmatpush1.msra.mxu0 0.0
  %1627 = vmatprep.subr.mxu0 0.0
  %1628 = vmatpush1.msra.mxu0 0.0
  %1629 = vmatprep.subr.mxu0 0.0
  %1630 = vmatpush1.msra.mxu0 0.0
  %1631 = vmatprep.subr.mxu0 0.0
  %1632 = vmatpush1.msra.mxu0 0.0
  %1633 = vmatprep.subr.mxu0 0.0
  %1634 = vmatpush1.msra.mxu0 0.0
  %1635 = vmatprep.subr.mxu0 0.0
  %1636 = vmatpush1.msra.mxu0 0.0
  %1637 = vmatprep.subr.mxu0 0.0
  %1638 = vmatpush1.msra.mxu0 0.0
  %1639 = vmatprep.subr.mxu0 0.0
  %1640 = vmatpush1.msra.mxu0 0.0
  %1641 = vmatprep.subr.mxu0 0.0
  %1642 = vmatpush1.msra.mxu0 0.0
  %1643 = vmatprep.subr.mxu0 0.0
  %1644 = vmatpush1.msra.mxu0 0.0
  %1645 = vmatprep.subr.mxu0 0.0
  %1646 = vmatpush1.msra.mxu0 0.0
  %1647 = vmatprep.subr.mxu0 0.0
  %1648 = vmatpush1.msra.mxu0 0.0
  %1649 = vmatprep.subr.mxu0 0.0
  %1650 = vmatpush1.msra.mxu0 0.0
  %1651 = vmatprep.subr.mxu0 0.0
  %1652 = vmatpush1.msra.mxu0 0.0
  %1653 = vmatprep.subr.mxu0 0.0
  %1654 = vmatpush1.msra.mxu0 0.0
  %1655 = vmatprep.subr.mxu0 0.0
  %1656 = vmatpush1.msra.mxu0 0.0
  %1657 = vmatprep.subr.mxu0 0.0
  %1658 = vmatpush1.msra.mxu0 0.0
  %1659 = vmatprep.subr.mxu0 0.0
  %1660 = vmatpush1.msra.mxu0 0.0
  %1661 = vmatprep.subr.mxu0 0.0
  %1662 = vmatpush1.msra.mxu0 0.0
  %1663 = vmatprep.mubr.f32.mxu0 0.0
  %1664 = vmatmul.mubr.f32.gmra.mrb[0].mxu0 %v1597
  %v1665 = vpop.f32.mrb[0].mxu0
  %v1666 = vadd.f32 %v179, %v1665
  %v1667 = vpop.f32.mrb[0].mxu0
  %1668 = vdwg.mxu0
  %v1669 = vadd.f32 %v168, %v1666
  %v1670 = vxor.u32 %v1669, 2147483648
  %v1671 = vmul.f32 %v1670, 1.442695
  %v1672 = vpow.pop %v1671
  %v1673 = vadd.f32 %v1672, 1.0
  %v1674 = vrcp.pop %v1673
  %v1675 = vmul.f32 1.0, %v1674
  %1677 = vrot.lane.b32.xlu0 %v1666, 64
  %v1678 = vpop.permute.xlu0 %1677
  %v1680 = vmul.f32 %v1675, %v1678
  %1682 = vrot.lane.b32.xlu0 %v1680, 64
  %v1683 = vpop.permute.xlu0 %1682
  %v1685 = vadd.f32 %v168, %v1683
  %v1686 = vtanh.pop %v1685
  %v1687 = vsub.f32 1.0, %v1675
  %1689 = vrot.lane.b32.xlu0 %v1686, 96
  %v1690 = vpop.permute.xlu0 %1689
  %v1692 = vmul.f32 %v1687, %v1690
  %v1693 = vmul.f32 %v1675, %v1593
  %v1694 = vadd.f32 %v1692, %v1693
  %1696 = vrot.lane.b32.xlu0 %v1694, 96
  %v1697 = vpop.permute.xlu0 %1696
  %v1698 = vsel %vm181, %v1697, 0
  %1700 = vmatprep.subr.mxu0 0.0
  %1701 = vmatpush1.msra.mxu0 %v170
  %1702 = vmatprep.subr.mxu0 0.0
  %1703 = vmatpush1.msra.mxu0 %v171
  %1704 = vmatprep.subr.mxu0 0.0
  %1705 = vmatpush1.msra.mxu0 %v172
  %1706 = vmatprep.subr.mxu0 0.0
  %1707 = vmatpush1.msra.mxu0 %v173
  %1708 = vmatprep.subr.mxu0 0.0
  %1709 = vmatpush1.msra.mxu0 0.0
  %1710 = vmatprep.subr.mxu0 0.0
  %1711 = vmatpush1.msra.mxu0 0.0
  %1712 = vmatprep.subr.mxu0 0.0
  %1713 = vmatpush1.msra.mxu0 0.0
  %1714 = vmatprep.subr.mxu0 0.0
  %1715 = vmatpush1.msra.mxu0 0.0
  %1716 = vmatprep.subr.mxu0 0.0
  %1717 = vmatpush1.msra.mxu0 0.0
  %1718 = vmatprep.subr.mxu0 0.0
  %1719 = vmatpush1.msra.mxu0 0.0
  %1720 = vmatprep.subr.mxu0 0.0
  %1721 = vmatpush1.msra.mxu0 0.0
  %1722 = vmatprep.subr.mxu0 0.0
  %1723 = vmatpush1.msra.mxu0 0.0
  %1724 = vmatprep.subr.mxu0 0.0
  %1725 = vmatpush1.msra.mxu0 0.0
  %1726 = vmatprep.subr.mxu0 0.0
  %1727 = vmatpush1.msra.mxu0 0.0
  %1728 = vmatprep.subr.mxu0 0.0
  %1729 = vmatpush1.msra.mxu0 0.0
  %1730 = vmatprep.subr.mxu0 0.0
  %1731 = vmatpush1.msra.mxu0 0.0
  %1732 = vmatprep.subr.mxu0 0.0
  %1733 = vmatpush1.msra.mxu0 0.0
  %1734 = vmatprep.subr.mxu0 0.0
  %1735 = vmatpush1.msra.mxu0 0.0
  %1736 = vmatprep.subr.mxu0 0.0
  %1737 = vmatpush1.msra.mxu0 0.0
  %1738 = vmatprep.subr.mxu0 0.0
  %1739 = vmatpush1.msra.mxu0 0.0
  %1740 = vmatprep.subr.mxu0 0.0
  %1741 = vmatpush1.msra.mxu0 0.0
  %1742 = vmatprep.subr.mxu0 0.0
  %1743 = vmatpush1.msra.mxu0 0.0
  %1744 = vmatprep.subr.mxu0 0.0
  %1745 = vmatpush1.msra.mxu0 0.0
  %1746 = vmatprep.subr.mxu0 0.0
  %1747 = vmatpush1.msra.mxu0 0.0
  %1748 = vmatprep.subr.mxu0 0.0
  %1749 = vmatpush1.msra.mxu0 0.0
  %1750 = vmatprep.subr.mxu0 0.0
  %1751 = vmatpush1.msra.mxu0 0.0
  %1752 = vmatprep.subr.mxu0 0.0
  %1753 = vmatpush1.msra.mxu0 0.0
  %1754 = vmatprep.subr.mxu0 0.0
  %1755 = vmatpush1.msra.mxu0 0.0
  %1756 = vmatprep.subr.mxu0 0.0
  %1757 = vmatpush1.msra.mxu0 0.0
  %1758 = vmatprep.subr.mxu0 0.0
  %1759 = vmatpush1.msra.mxu0 0.0
  %1760 = vmatprep.subr.mxu0 0.0
  %1761 = vmatpush1.msra.mxu0 0.0
  %1762 = vmatprep.subr.mxu0 0.0
  %1763 = vmatpush1.msra.mxu0 0.0
  %1764 = vmatprep.mubr.f32.mxu0 0.0
  %1765 = vmatmul.mubr.f32.gmra.mrb[0].mxu0 %v1698
  %v1766 = vpop.f32.mrb[0].mxu0
  %v1767 = vadd.f32 %v179, %v1766
  %v1768 = vpop.f32.mrb[0].mxu0
  %1769 = vdwg.mxu0
  %v1770 = vadd.f32 %v169, %v1767
  %v1771 = vxor.u32 %v1770, 2147483648
  %v1772 = vmul.f32 %v1771, 1.442695
  %v1773 = vpow.pop %v1772
  %v1774 = vadd.f32 %v1773, 1.0
  %v1775 = vrcp.pop %v1774
  %v1776 = vmul.f32 1.0, %v1775
  %1778 = vrot.lane.b32.xlu0 %v1767, 64
  %v1779 = vpop.permute.xlu0 %1778
  %v1781 = vmul.f32 %v1776, %v1779
  %1783 = vrot.lane.b32.xlu0 %v1781, 64
  %v1784 = vpop.permute.xlu0 %1783
  %v1786 = vadd.f32 %v169, %v1784
  %v1787 = vtanh.pop %v1786
  %v1788 = vsub.f32 1.0, %v1776
  %1790 = vrot.lane.b32.xlu0 %v1787, 96
  %v1791 = vpop.permute.xlu0 %1790
  %v1793 = vmul.f32 %v1788, %v1791
  %v1794 = vmul.f32 %v1776, %v1694
  %v1795 = vadd.f32 %v1793, %v1794
  %v1796 = vld [vmem:[%s5] sm:$0x1]
  %v1798 = vlaneseq
  %v1799 = vshrl.u32 %v1798, 7
  %v1800 = vsub.s32 0, %v1799
  %v1801 = vrot.slane %v1796, %v1800
  %1802 = vrot.lane.b32.xlu0 %v1801, 32
  %v1803 = vpop.permute.xlu0 %1802
  %v1805 = vmul.f32 %v1795, %v1803
  %1807 = vrot.lane.b32.xlu0 %v1805, 96
  %v1808 = vpop.permute.xlu0 %1807
  %v1810 = vsel %vm181, %v1808, 0.0
  %1811 = vadd.xlane.f32.xlu0 %v1810
  %v1812 = vpop.xlane.xlu0 %1811
  %v1813 = vld [vmem:[#allocation2] sm:$0x1]
  %v1815 = vlaneseq
  %v1816 = vshrl.u32 %v1815, 7
  %v1817 = vsub.s32 0, %v1816
  %v1818 = vrot.slane %v1813, %v1817
  %v1820 = vadd.f32 %v1812, %v1818
  %v1821 = vxor.u32 %v1820, 2147483648
  %v1822 = vmul.f32 %v1821, 1.442695
  %v1823 = vpow.pop %v1822
  %v1824 = vadd.f32 %v1823, 1.0
  %v1825 = vrcp.pop %v1824
  %v1826 = vmul.f32 1.0, %v1825
  %vm1827 = vcmask 7168
  %1828 = vst.msk [vmem:[%s7] sm:$0xff] %vm1827, %v1826
  // Predicated region
  $region30: #{tpu_custom_call.1} parent=0 // pred_check
    _
  $region31: #{tpu_custom_call.1} parent=0 // pred_check_branch
    %1830 = sbr.rel (0) target = $region33
  $region32: #{tpu_custom_call.1} parent=0 // pred_region
    _
  $region33: #{tpu_custom_call.1} parent=0 // pred_fallthru
    _
  // Predicated region
  $region34: #{tpu_custom_call.1} parent=0 // pred_check
    _
  $region35: #{tpu_custom_call.1} parent=0 // pred_check_branch
    %1832 = sbr.rel (0) target = $region37
  $region36: #{tpu_custom_call.1} parent=0 // pred_region
    _
  $region37: #{tpu_custom_call.1} parent=0 // pred_fallthru
    _

</llo_original>
